<compile_context>
chip_gen: v6e
topology: v6e:2x2x1
jax: 0.10.0
libtpu: 0.0.40
codegen_flags: <defaults>
</compile_context>

<pallas_src>
import functools

import jax
import jax.numpy as jnp
from jax.experimental import pallas as pl
from jax.experimental.pallas import tpu as pltpu  # noqa: F401  (TPU backend assumed)


# ----------------------------- fused kernel ---------------------------------

def _mlp_block(x, w1, b1, w2, b2, gamma, beta):
    """MLPBlock: LN( Linear2(relu(Linear1(x))) + x ); dropout == identity (eval)."""
    h = jnp.dot(x, w1, preferred_element_type=jnp.float32) + b1
    h = jnp.maximum(h, 0.0)
    y = jnp.dot(h, w2, preferred_element_type=jnp.float32) + b2
    z = y + x
    mean = jnp.mean(z, axis=-1, keepdims=True)
    var = jnp.mean(z * z, axis=-1, keepdims=True) - mean * mean  # biased variance
    zn = (z - mean) * jax.lax.rsqrt(var + 1e-5)
    return zn * gamma + beta


def fused_forward_kernel(
        x_ref, m_ref,                                           # [EC*B, Kp], [EC*B, 1]
        we_ref, be_ref,                                         # [Kp, D], [1, D]
        w1i_ref, b1i_ref, w2i_ref, b2i_ref, gi_ref, bti_ref,    # intra MLP stacks
        wf_ref, bf_ref,                                         # [EC, D, D], [1, D]
        w1d_ref, b1d_ref, w2d_ref, b2d_ref, gd_ref, btd_ref,    # inter MLP stacks
        wh_ref, bh_ref,                                         # [D, 1], [1, 1]
        o_ref,                                                  # [B, 1]
        *, e_layers, d_layers, ec, batch):
    # ---- intra-cycle branch: zero masked cycles, embed --------------------
    x = x_ref[...] * m_ref[...]
    h = jnp.dot(x, we_ref[...], preferred_element_type=jnp.float32) + be_ref[...]

    # ---- intra MLP blocks (statically unrolled; weights read per layer) ----
    for l in range(e_layers):
        h = _mlp_block(h, w1i_ref[l], b1i_ref[l], w2i_ref[l], b2i_ref[l],
                       gi_ref[l], bti_ref[l])

    # ---- inter flatten + linear -------------------------------------------
    # Rows are ec-major (row = e*B + b), so flatten(start_dim=1) + Linear becomes
    # g = sum_e h[e*B:(e+1)*B, :] @ Wf[e]  with Wf = w_f.reshape(EC, D, D).
    d_model = h.shape[-1]
    g = jnp.zeros((batch, d_model), jnp.float32)
    for e in range(ec):
        g = g + jnp.dot(h[e * batch:(e + 1) * batch, :], wf_ref[e],
                        preferred_element_type=jnp.float32)
    g = g + bf_ref[...]

    # ---- inter MLP blocks ---------------------------------------------------
    for l in range(d_layers):
        g = _mlp_block(g, w1d_ref[l], b1d_ref[l], w2d_ref[l], b2d_ref[l],
                       gd_ref[l], btd_ref[l])

    # ---- head: Linear(relu(g)) -> [B, 1] ------------------------------------
    r = jnp.maximum(g, 0.0)
    o_ref[...] = (jnp.dot(r, wh_ref[...], preferred_element_type=jnp.float32)
                  + bh_ref[...])


# ----------------------------- pallas_call wrapper ---------------------------

def _full_spec(shape):
    # Whole-array block, no grid; everything fits VMEM simultaneously.
    return pl.BlockSpec(tuple(shape), lambda: (0,) * len(shape))


def fused_forward(x, m, p, *, ec, batch, e_layers, d_layers):
    kernel = functools.partial(fused_forward_kernel, e_layers=e_layers,
                               d_layers=d_layers, ec=ec, batch=batch)
    args = (x, m,
            p["we"], p["be"],
            p["w1i"], p["b1i"], p["w2i"], p["b2i"], p["gi"], p["bti"],
            p["wf3"], p["bf"],
            p["w1d"], p["b1d"], p["w2d"], p["b2d"], p["gd"], p["btd"],
            p["wh"], p["bh"])
    return pl.pallas_call(
        kernel,
        out_shape=jax.ShapeDtypeStruct((batch, 1), jnp.float32),
        in_specs=[_full_spec(a.shape) for a in args],
        out_specs=_full_spec((batch, 1)),
    )(*args)


# ----------------------------- parameter construction ------------------------

def _round_up(x, m):
    return ((x + m - 1) // m) * m


def _init_linear(key, fan_in, fan_out, scale=0.02):
    kw, kb = jax.random.split(key)
    w = scale * jax.random.normal(kw, (fan_in, fan_out), jnp.float32)
    b = scale * jax.random.normal(kb, (1, fan_out), jnp.float32)
    return w, b


def init_model_params(key, cfg):
    d_model, d_ff = cfg["d_model"], cfg["d_ff"]
    ec = cfg["early_cycle_threshold"]
    e_layers, d_layers = cfg["e_layers"], cfg["d_layers"]
    in_dim = cfg["charge_discharge_length"] * 3
    in_dim_pad = _round_up(in_dim, 64)         # zero-padded contraction dim

    keys = jax.random.split(key, 3 + e_layers + d_layers)

    we, be = _init_linear(keys[0], in_dim, d_model)
    we = jnp.pad(we, ((0, in_dim_pad - in_dim), (0, 0)))   # padded rows are zero

    wf, bf = _init_linear(keys[1], ec * d_model, d_model)
    wf3 = wf.reshape(ec, d_model, d_model)     # wf3[e, d, :] == wf[e*d_model + d, :]

    wh, bh = _init_linear(keys[2], d_model, 1)

    def stack_blocks(block_keys):
        w1s, b1s, w2s, b2s, gs, bts = [], [], [], [], [], []
        for k in block_keys:
            k1, k2 = jax.random.split(k)
            w1, b1 = _init_linear(k1, d_model, d_ff)
            w2, b2 = _init_linear(k2, d_ff, d_model)
            w1s.append(w1); b1s.append(b1); w2s.append(w2); b2s.append(b2)
            gs.append(jnp.ones((1, d_model), jnp.float32))
            bts.append(jnp.zeros((1, d_model), jnp.float32))
        return (jnp.stack(w1s), jnp.stack(b1s), jnp.stack(w2s), jnp.stack(b2s),
                jnp.stack(gs), jnp.stack(bts))

    w1i, b1i, w2i, b2i, gi, bti = stack_blocks(keys[3:3 + e_layers])
    w1d, b1d, w2d, b2d, gd, btd = stack_blocks(keys[3 + e_layers:])

    return dict(we=we, be=be, wf3=wf3, bf=bf, wh=wh, bh=bh,
                w1i=w1i, b1i=b1i, w2i=w2i, b2i=b2i, gi=gi, bti=bti,
                w1d=w1d, b1d=b1d, w2d=w2d, b2d=b2d, gd=gd, btd=btd)


# ----------------------------- forward pass ----------------------------------

@jax.jit
def model_forward(params, cycle_curve_data, curve_attn_mask):
    """
    cycle_curve_data: [B, EC, L, V]  (V == 3)
    curve_attn_mask:  [B, EC]
    returns preds:    [B, 1]
    """
    B, EC, L, V = cycle_curve_data.shape
    kp = params["we"].shape[0]                 # padded contraction dim (static)
    e_layers = params["w1i"].shape[0]
    d_layers = params["w1d"].shape[0]

    # ec-major row layout (row = ec*B + b) + zero-pad of the flattened curve dim.
    x = jnp.transpose(cycle_curve_data, (1, 0, 2, 3)).reshape(EC * B, L * V)
    x = jnp.pad(x.astype(jnp.float32), ((0, 0), (0, kp - L * V)))
    m = jnp.transpose(curve_attn_mask, (1, 0)).reshape(EC * B, 1).astype(jnp.float32)

    # TODO(synk): dropout is a no-op here (eval-mode forward); training-mode RNG
    # dropout via pltpu.prng_* not implemented.
    return fused_forward(x, m, params, ec=EC, batch=B,
                         e_layers=e_layers, d_layers=d_layers)


# ----------------------------- main -------------------------------------------

if __name__ == "__main__":
    cfg = dict(
        d_model=32,
        d_ff=64,
        charge_discharge_length=16,
        early_cycle_threshold=8,
        e_layers=2,
        d_layers=2,
        dropout=0.1,   # identity at inference; kept for completeness
    )

    key = jax.random.PRNGKey(0)
    k_params, k_data, k_mask = jax.random.split(key, 3)

    params = init_model_params(k_params, cfg)

    B = 2
    EC = cfg["early_cycle_threshold"]
    L = cfg["charge_discharge_length"]
    V = 3
    cycle_curve_data = jax.random.normal(k_data, (B, EC, L, V), jnp.float32)
    curve_attn_mask = (jax.random.uniform(k_mask, (B, EC)) > 0.3).astype(jnp.float32)

    preds = model_forward(params, cycle_curve_data, curve_attn_mask)
    preds = jax.block_until_ready(preds)
    assert preds.shape == (B, 1)
    print("KERNEL_OK")
</pallas_src>

<mosaic_0001>
module attributes {stable_mosaic.version = 11 : i64} {
  func.func @fused_forward_kernel(%arg0: memref<16x64xf32, #tpu.memory_space<vmem>>, %arg1: memref<16x1xf32, #tpu.memory_space<vmem>>, %arg2: memref<64x32xf32, #tpu.memory_space<vmem>>, %arg3: memref<1x32xf32, #tpu.memory_space<vmem>>, %arg4: memref<2x32x64xf32, #tpu.memory_space<vmem>>, %arg5: memref<2x1x64xf32, #tpu.memory_space<vmem>>, %arg6: memref<2x64x32xf32, #tpu.memory_space<vmem>>, %arg7: memref<2x1x32xf32, #tpu.memory_space<vmem>>, %arg8: memref<2x1x32xf32, #tpu.memory_space<vmem>>, %arg9: memref<2x1x32xf32, #tpu.memory_space<vmem>>, %arg10: memref<8x32x32xf32, #tpu.memory_space<vmem>>, %arg11: memref<1x32xf32, #tpu.memory_space<vmem>>, %arg12: memref<2x32x64xf32, #tpu.memory_space<vmem>>, %arg13: memref<2x1x64xf32, #tpu.memory_space<vmem>>, %arg14: memref<2x64x32xf32, #tpu.memory_space<vmem>>, %arg15: memref<2x1x32xf32, #tpu.memory_space<vmem>>, %arg16: memref<2x1x32xf32, #tpu.memory_space<vmem>>, %arg17: memref<2x1x32xf32, #tpu.memory_space<vmem>>, %arg18: memref<32x1xf32, #tpu.memory_space<vmem>>, %arg19: memref<1x1xf32, #tpu.memory_space<vmem>>, %arg20: memref<2x1xf32, #tpu.memory_space<vmem>>) attributes {dimension_semantics = [], scalar_prefetch = 0 : i64, scratch_operands = 0 : i64, tpu.core_type = #tpu.core_type<tc>} {
    %c0 = arith.constant 0 : index
    %c0_0 = arith.constant 0 : index
    %0 = vector.load %arg0[%c0, %c0_0] : memref<16x64xf32, #tpu.memory_space<vmem>>, vector<16x64xf32>
    %c0_1 = arith.constant 0 : index
    %c0_2 = arith.constant 0 : index
    %1 = vector.load %arg1[%c0_1, %c0_2] : memref<16x1xf32, #tpu.memory_space<vmem>>, vector<16x1xf32>
    %2 = vector.broadcast %1 : vector<16x1xf32> to vector<16x64xf32>
    %3 = arith.mulf %0, %2 : vector<16x64xf32>
    %c0_3 = arith.constant 0 : index
    %c0_4 = arith.constant 0 : index
    %4 = vector.load %arg2[%c0_3, %c0_4] : memref<64x32xf32, #tpu.memory_space<vmem>>, vector<64x32xf32>
    %cst = arith.constant dense<0.000000e+00> : vector<16x32xf32>
    %5 = tpu.matmul %3, %4, %cst {dimension_numbers = #tpu.dot_dimension_numbers<[1], [0], [0], [1], [0, 0, 1, 1], [], []>} : vector<16x64xf32>, vector<64x32xf32>, vector<16x32xf32> -> vector<16x32xf32>
    %c0_5 = arith.constant 0 : index
    %c0_6 = arith.constant 0 : index
    %6 = vector.load %arg3[%c0_5, %c0_6] : memref<1x32xf32, #tpu.memory_space<vmem>>, vector<1x32xf32>
    %7 = vector.broadcast %6 : vector<1x32xf32> to vector<16x32xf32>
    %8 = arith.addf %5, %7 : vector<16x32xf32>
    %c0_7 = arith.constant 0 : index
    %c0_8 = arith.constant 0 : index
    %c0_9 = arith.constant 0 : index
    %9 = vector.load %arg4[%c0_7, %c0_8, %c0_9] : memref<2x32x64xf32, #tpu.memory_space<vmem>>, vector<1x32x64xf32>
    %10 = vector.shape_cast %9 : vector<1x32x64xf32> to vector<32x64xf32>
    %c0_10 = arith.constant 0 : index
    %c0_11 = arith.constant 0 : index
    %c0_12 = arith.constant 0 : index
    %11 = vector.load %arg5[%c0_10, %c0_11, %c0_12] : memref<2x1x64xf32, #tpu.memory_space<vmem>>, vector<1x1x64xf32>
    %12 = vector.shape_cast %11 : vector<1x1x64xf32> to vector<1x64xf32>
    %c0_13 = arith.constant 0 : index
    %c0_14 = arith.constant 0 : index
    %c0_15 = arith.constant 0 : index
    %13 = vector.load %arg6[%c0_13, %c0_14, %c0_15] : memref<2x64x32xf32, #tpu.memory_space<vmem>>, vector<1x64x32xf32>
    %14 = vector.shape_cast %13 : vector<1x64x32xf32> to vector<64x32xf32>
    %c0_16 = arith.constant 0 : index
    %c0_17 = arith.constant 0 : index
    %c0_18 = arith.constant 0 : index
    %15 = vector.load %arg7[%c0_16, %c0_17, %c0_18] : memref<2x1x32xf32, #tpu.memory_space<vmem>>, vector<1x1x32xf32>
    %16 = vector.shape_cast %15 : vector<1x1x32xf32> to vector<1x32xf32>
    %c0_19 = arith.constant 0 : index
    %c0_20 = arith.constant 0 : index
    %c0_21 = arith.constant 0 : index
    %17 = vector.load %arg8[%c0_19, %c0_20, %c0_21] : memref<2x1x32xf32, #tpu.memory_space<vmem>>, vector<1x1x32xf32>
    %18 = vector.shape_cast %17 : vector<1x1x32xf32> to vector<1x32xf32>
    %c0_22 = arith.constant 0 : index
    %c0_23 = arith.constant 0 : index
    %c0_24 = arith.constant 0 : index
    %19 = vector.load %arg9[%c0_22, %c0_23, %c0_24] : memref<2x1x32xf32, #tpu.memory_space<vmem>>, vector<1x1x32xf32>
    %20 = vector.shape_cast %19 : vector<1x1x32xf32> to vector<1x32xf32>
    %cst_25 = arith.constant dense<0.000000e+00> : vector<16x64xf32>
    %21 = tpu.matmul %8, %10, %cst_25 {dimension_numbers = #tpu.dot_dimension_numbers<[1], [0], [0], [1], [0, 0, 1, 1], [], []>} : vector<16x32xf32>, vector<32x64xf32>, vector<16x64xf32> -> vector<16x64xf32>
    %22 = vector.broadcast %12 : vector<1x64xf32> to vector<16x64xf32>
    %23 = arith.addf %21, %22 : vector<16x64xf32>
    %cst_26 = arith.constant 0.000000e+00 : f32
    %24 = vector.broadcast %cst_26 : f32 to vector<16x64xf32>
    %25 = arith.maximumf %23, %24 : vector<16x64xf32>
    %cst_27 = arith.constant dense<0.000000e+00> : vector<16x32xf32>
    %26 = tpu.matmul %25, %14, %cst_27 {dimension_numbers = #tpu.dot_dimension_numbers<[1], [0], [0], [1], [0, 0, 1, 1], [], []>} : vector<16x64xf32>, vector<64x32xf32>, vector<16x32xf32> -> vector<16x32xf32>
    %27 = vector.broadcast %16 : vector<1x32xf32> to vector<16x32xf32>
    %28 = arith.addf %26, %27 : vector<16x32xf32>
    %29 = arith.addf %28, %8 : vector<16x32xf32>
    %cst_28 = arith.constant dense<0.000000e+00> : vector<16xf32>
    %30 = vector.multi_reduction <add>, %29, %cst_28 [1] : vector<16x32xf32> to vector<16xf32>
    %31 = vector.shape_cast %30 : vector<16xf32> to vector<16x1xf32>
    %cst_29 = arith.constant 3.200000e+01 : f32
    %32 = vector.broadcast %cst_29 : f32 to vector<16x1xf32>
    %33 = arith.divf %31, %32 : vector<16x1xf32>
    %34 = arith.mulf %29, %29 : vector<16x32xf32>
    %cst_30 = arith.constant dense<0.000000e+00> : vector<16xf32>
    %35 = vector.multi_reduction <add>, %34, %cst_30 [1] : vector<16x32xf32> to vector<16xf32>
    %36 = vector.shape_cast %35 : vector<16xf32> to vector<16x1xf32>
    %cst_31 = arith.constant 3.200000e+01 : f32
    %37 = vector.broadcast %cst_31 : f32 to vector<16x1xf32>
    %38 = arith.divf %36, %37 : vector<16x1xf32>
    %39 = arith.mulf %33, %33 : vector<16x1xf32>
    %40 = arith.subf %38, %39 : vector<16x1xf32>
    %41 = vector.broadcast %33 : vector<16x1xf32> to vector<16x32xf32>
    %42 = arith.subf %29, %41 : vector<16x32xf32>
    %cst_32 = arith.constant 9.99999974E-6 : f32
    %43 = vector.broadcast %cst_32 : f32 to vector<16x1xf32>
    %44 = arith.addf %40, %43 : vector<16x1xf32>
    %45 = math.rsqrt %44 : vector<16x1xf32>
    %46 = vector.broadcast %45 : vector<16x1xf32> to vector<16x32xf32>
    %47 = arith.mulf %42, %46 : vector<16x32xf32>
    %48 = vector.broadcast %18 : vector<1x32xf32> to vector<16x32xf32>
    %49 = arith.mulf %47, %48 : vector<16x32xf32>
    %50 = vector.broadcast %20 : vector<1x32xf32> to vector<16x32xf32>
    %51 = arith.addf %49, %50 : vector<16x32xf32>
    %c1 = arith.constant 1 : index
    %c0_33 = arith.constant 0 : index
    %c0_34 = arith.constant 0 : index
    %52 = vector.load %arg4[%c1, %c0_33, %c0_34] : memref<2x32x64xf32, #tpu.memory_space<vmem>>, vector<1x32x64xf32>
    %53 = vector.shape_cast %52 : vector<1x32x64xf32> to vector<32x64xf32>
    %c1_35 = arith.constant 1 : index
    %c0_36 = arith.constant 0 : index
    %c0_37 = arith.constant 0 : index
    %54 = vector.load %arg5[%c1_35, %c0_36, %c0_37] : memref<2x1x64xf32, #tpu.memory_space<vmem>>, vector<1x1x64xf32>
    %55 = vector.shape_cast %54 : vector<1x1x64xf32> to vector<1x64xf32>
    %c1_38 = arith.constant 1 : index
    %c0_39 = arith.constant 0 : index
    %c0_40 = arith.constant 0 : index
    %56 = vector.load %arg6[%c1_38, %c0_39, %c0_40] : memref<2x64x32xf32, #tpu.memory_space<vmem>>, vector<1x64x32xf32>
    %57 = vector.shape_cast %56 : vector<1x64x32xf32> to vector<64x32xf32>
    %c1_41 = arith.constant 1 : index
    %c0_42 = arith.constant 0 : index
    %c0_43 = arith.constant 0 : index
    %58 = vector.load %arg7[%c1_41, %c0_42, %c0_43] : memref<2x1x32xf32, #tpu.memory_space<vmem>>, vector<1x1x32xf32>
    %59 = vector.shape_cast %58 : vector<1x1x32xf32> to vector<1x32xf32>
    %c1_44 = arith.constant 1 : index
    %c0_45 = arith.constant 0 : index
    %c0_46 = arith.constant 0 : index
    %60 = vector.load %arg8[%c1_44, %c0_45, %c0_46] : memref<2x1x32xf32, #tpu.memory_space<vmem>>, vector<1x1x32xf32>
    %61 = vector.shape_cast %60 : vector<1x1x32xf32> to vector<1x32xf32>
    %c1_47 = arith.constant 1 : index
    %c0_48 = arith.constant 0 : index
    %c0_49 = arith.constant 0 : index
    %62 = vector.load %arg9[%c1_47, %c0_48, %c0_49] : memref<2x1x32xf32, #tpu.memory_space<vmem>>, vector<1x1x32xf32>
    %63 = vector.shape_cast %62 : vector<1x1x32xf32> to vector<1x32xf32>
    %cst_50 = arith.constant dense<0.000000e+00> : vector<16x64xf32>
    %64 = tpu.matmul %51, %53, %cst_50 {dimension_numbers = #tpu.dot_dimension_numbers<[1], [0], [0], [1], [0, 0, 1, 1], [], []>} : vector<16x32xf32>, vector<32x64xf32>, vector<16x64xf32> -> vector<16x64xf32>
    %65 = vector.broadcast %55 : vector<1x64xf32> to vector<16x64xf32>
    %66 = arith.addf %64, %65 : vector<16x64xf32>
    %cst_51 = arith.constant 0.000000e+00 : f32
    %67 = vector.broadcast %cst_51 : f32 to vector<16x64xf32>
    %68 = arith.maximumf %66, %67 : vector<16x64xf32>
    %cst_52 = arith.constant dense<0.000000e+00> : vector<16x32xf32>
    %69 = tpu.matmul %68, %57, %cst_52 {dimension_numbers = #tpu.dot_dimension_numbers<[1], [0], [0], [1], [0, 0, 1, 1], [], []>} : vector<16x64xf32>, vector<64x32xf32>, vector<16x32xf32> -> vector<16x32xf32>
    %70 = vector.broadcast %59 : vector<1x32xf32> to vector<16x32xf32>
    %71 = arith.addf %69, %70 : vector<16x32xf32>
    %72 = arith.addf %71, %51 : vector<16x32xf32>
    %cst_53 = arith.constant dense<0.000000e+00> : vector<16xf32>
    %73 = vector.multi_reduction <add>, %72, %cst_53 [1] : vector<16x32xf32> to vector<16xf32>
    %74 = vector.shape_cast %73 : vector<16xf32> to vector<16x1xf32>
    %cst_54 = arith.constant 3.200000e+01 : f32
    %75 = vector.broadcast %cst_54 : f32 to vector<16x1xf32>
    %76 = arith.divf %74, %75 : vector<16x1xf32>
    %77 = arith.mulf %72, %72 : vector<16x32xf32>
    %cst_55 = arith.constant dense<0.000000e+00> : vector<16xf32>
    %78 = vector.multi_reduction <add>, %77, %cst_55 [1] : vector<16x32xf32> to vector<16xf32>
    %79 = vector.shape_cast %78 : vector<16xf32> to vector<16x1xf32>
    %cst_56 = arith.constant 3.200000e+01 : f32
    %80 = vector.broadcast %cst_56 : f32 to vector<16x1xf32>
    %81 = arith.divf %79, %80 : vector<16x1xf32>
    %82 = arith.mulf %76, %76 : vector<16x1xf32>
    %83 = arith.subf %81, %82 : vector<16x1xf32>
    %84 = vector.broadcast %76 : vector<16x1xf32> to vector<16x32xf32>
    %85 = arith.subf %72, %84 : vector<16x32xf32>
    %cst_57 = arith.constant 9.99999974E-6 : f32
    %86 = vector.broadcast %cst_57 : f32 to vector<16x1xf32>
    %87 = arith.addf %83, %86 : vector<16x1xf32>
    %88 = math.rsqrt %87 : vector<16x1xf32>
    %89 = vector.broadcast %88 : vector<16x1xf32> to vector<16x32xf32>
    %90 = arith.mulf %85, %89 : vector<16x32xf32>
    %91 = vector.broadcast %61 : vector<1x32xf32> to vector<16x32xf32>
    %92 = arith.mulf %90, %91 : vector<16x32xf32>
    %93 = vector.broadcast %63 : vector<1x32xf32> to vector<16x32xf32>
    %94 = arith.addf %92, %93 : vector<16x32xf32>
    %cst_58 = arith.constant 0.000000e+00 : f32
    %95 = vector.broadcast %cst_58 : f32 to vector<2x32xf32>
    %96 = vector.extract_strided_slice %94 {offsets = [0, 0], sizes = [2, 32], strides = [1, 1]} : vector<16x32xf32> to vector<2x32xf32>
    %c0_59 = arith.constant 0 : index
    %c0_60 = arith.constant 0 : index
    %c0_61 = arith.constant 0 : index
    %97 = vector.load %arg10[%c0_59, %c0_60, %c0_61] : memref<8x32x32xf32, #tpu.memory_space<vmem>>, vector<1x32x32xf32>
    %98 = vector.shape_cast %97 : vector<1x32x32xf32> to vector<32x32xf32>
    %cst_62 = arith.constant dense<0.000000e+00> : vector<2x32xf32>
    %99 = tpu.matmul %96, %98, %cst_62 {dimension_numbers = #tpu.dot_dimension_numbers<[1], [0], [0], [1], [0, 0, 1, 1], [], []>} : vector<2x32xf32>, vector<32x32xf32>, vector<2x32xf32> -> vector<2x32xf32>
    %100 = arith.addf %95, %99 : vector<2x32xf32>
    %101 = vector.extract_strided_slice %94 {offsets = [2, 0], sizes = [2, 32], strides = [1, 1]} : vector<16x32xf32> to vector<2x32xf32>
    %c1_63 = arith.constant 1 : index
    %c0_64 = arith.constant 0 : index
    %c0_65 = arith.constant 0 : index
    %102 = vector.load %arg10[%c1_63, %c0_64, %c0_65] : memref<8x32x32xf32, #tpu.memory_space<vmem>>, vector<1x32x32xf32>
    %103 = vector.shape_cast %102 : vector<1x32x32xf32> to vector<32x32xf32>
    %cst_66 = arith.constant dense<0.000000e+00> : vector<2x32xf32>
    %104 = tpu.matmul %101, %103, %cst_66 {dimension_numbers = #tpu.dot_dimension_numbers<[1], [0], [0], [1], [0, 0, 1, 1], [], []>} : vector<2x32xf32>, vector<32x32xf32>, vector<2x32xf32> -> vector<2x32xf32>
    %105 = arith.addf %100, %104 : vector<2x32xf32>
    %106 = vector.extract_strided_slice %94 {offsets = [4, 0], sizes = [2, 32], strides = [1, 1]} : vector<16x32xf32> to vector<2x32xf32>
    %c2 = arith.constant 2 : index
    %c0_67 = arith.constant 0 : index
    %c0_68 = arith.constant 0 : index
    %107 = vector.load %arg10[%c2, %c0_67, %c0_68] : memref<8x32x32xf32, #tpu.memory_space<vmem>>, vector<1x32x32xf32>
    %108 = vector.shape_cast %107 : vector<1x32x32xf32> to vector<32x32xf32>
    %cst_69 = arith.constant dense<0.000000e+00> : vector<2x32xf32>
    %109 = tpu.matmul %106, %108, %cst_69 {dimension_numbers = #tpu.dot_dimension_numbers<[1], [0], [0], [1], [0, 0, 1, 1], [], []>} : vector<2x32xf32>, vector<32x32xf32>, vector<2x32xf32> -> vector<2x32xf32>
    %110 = arith.addf %105, %109 : vector<2x32xf32>
    %111 = vector.extract_strided_slice %94 {offsets = [6, 0], sizes = [2, 32], strides = [1, 1]} : vector<16x32xf32> to vector<2x32xf32>
    %c3 = arith.constant 3 : index
    %c0_70 = arith.constant 0 : index
    %c0_71 = arith.constant 0 : index
    %112 = vector.load %arg10[%c3, %c0_70, %c0_71] : memref<8x32x32xf32, #tpu.memory_space<vmem>>, vector<1x32x32xf32>
    %113 = vector.shape_cast %112 : vector<1x32x32xf32> to vector<32x32xf32>
    %cst_72 = arith.constant dense<0.000000e+00> : vector<2x32xf32>
    %114 = tpu.matmul %111, %113, %cst_72 {dimension_numbers = #tpu.dot_dimension_numbers<[1], [0], [0], [1], [0, 0, 1, 1], [], []>} : vector<2x32xf32>, vector<32x32xf32>, vector<2x32xf32> -> vector<2x32xf32>
    %115 = arith.addf %110, %114 : vector<2x32xf32>
    %116 = vector.extract_strided_slice %94 {offsets = [8, 0], sizes = [2, 32], strides = [1, 1]} : vector<16x32xf32> to vector<2x32xf32>
    %c4 = arith.constant 4 : index
    %c0_73 = arith.constant 0 : index
    %c0_74 = arith.constant 0 : index
    %117 = vector.load %arg10[%c4, %c0_73, %c0_74] : memref<8x32x32xf32, #tpu.memory_space<vmem>>, vector<1x32x32xf32>
    %118 = vector.shape_cast %117 : vector<1x32x32xf32> to vector<32x32xf32>
    %cst_75 = arith.constant dense<0.000000e+00> : vector<2x32xf32>
    %119 = tpu.matmul %116, %118, %cst_75 {dimension_numbers = #tpu.dot_dimension_numbers<[1], [0], [0], [1], [0, 0, 1, 1], [], []>} : vector<2x32xf32>, vector<32x32xf32>, vector<2x32xf32> -> vector<2x32xf32>
    %120 = arith.addf %115, %119 : vector<2x32xf32>
    %121 = vector.extract_strided_slice %94 {offsets = [10, 0], sizes = [2, 32], strides = [1, 1]} : vector<16x32xf32> to vector<2x32xf32>
    %c5 = arith.constant 5 : index
    %c0_76 = arith.constant 0 : index
    %c0_77 = arith.constant 0 : index
    %122 = vector.load %arg10[%c5, %c0_76, %c0_77] : memref<8x32x32xf32, #tpu.memory_space<vmem>>, vector<1x32x32xf32>
    %123 = vector.shape_cast %122 : vector<1x32x32xf32> to vector<32x32xf32>
    %cst_78 = arith.constant dense<0.000000e+00> : vector<2x32xf32>
    %124 = tpu.matmul %121, %123, %cst_78 {dimension_numbers = #tpu.dot_dimension_numbers<[1], [0], [0], [1], [0, 0, 1, 1], [], []>} : vector<2x32xf32>, vector<32x32xf32>, vector<2x32xf32> -> vector<2x32xf32>
    %125 = arith.addf %120, %124 : vector<2x32xf32>
    %126 = vector.extract_strided_slice %94 {offsets = [12, 0], sizes = [2, 32], strides = [1, 1]} : vector<16x32xf32> to vector<2x32xf32>
    %c6 = arith.constant 6 : index
    %c0_79 = arith.constant 0 : index
    %c0_80 = arith.constant 0 : index
    %127 = vector.load %arg10[%c6, %c0_79, %c0_80] : memref<8x32x32xf32, #tpu.memory_space<vmem>>, vector<1x32x32xf32>
    %128 = vector.shape_cast %127 : vector<1x32x32xf32> to vector<32x32xf32>
    %cst_81 = arith.constant dense<0.000000e+00> : vector<2x32xf32>
    %129 = tpu.matmul %126, %128, %cst_81 {dimension_numbers = #tpu.dot_dimension_numbers<[1], [0], [0], [1], [0, 0, 1, 1], [], []>} : vector<2x32xf32>, vector<32x32xf32>, vector<2x32xf32> -> vector<2x32xf32>
    %130 = arith.addf %125, %129 : vector<2x32xf32>
    %131 = vector.extract_strided_slice %94 {offsets = [14, 0], sizes = [2, 32], strides = [1, 1]} : vector<16x32xf32> to vector<2x32xf32>
    %c7 = arith.constant 7 : index
    %c0_82 = arith.constant 0 : index
    %c0_83 = arith.constant 0 : index
    %132 = vector.load %arg10[%c7, %c0_82, %c0_83] : memref<8x32x32xf32, #tpu.memory_space<vmem>>, vector<1x32x32xf32>
    %133 = vector.shape_cast %132 : vector<1x32x32xf32> to vector<32x32xf32>
    %cst_84 = arith.constant dense<0.000000e+00> : vector<2x32xf32>
    %134 = tpu.matmul %131, %133, %cst_84 {dimension_numbers = #tpu.dot_dimension_numbers<[1], [0], [0], [1], [0, 0, 1, 1], [], []>} : vector<2x32xf32>, vector<32x32xf32>, vector<2x32xf32> -> vector<2x32xf32>
    %135 = arith.addf %130, %134 : vector<2x32xf32>
    %c0_85 = arith.constant 0 : index
    %c0_86 = arith.constant 0 : index
    %136 = vector.load %arg11[%c0_85, %c0_86] : memref<1x32xf32, #tpu.memory_space<vmem>>, vector<1x32xf32>
    %137 = vector.broadcast %136 : vector<1x32xf32> to vector<2x32xf32>
    %138 = arith.addf %135, %137 : vector<2x32xf32>
    %c0_87 = arith.constant 0 : index
    %c0_88 = arith.constant 0 : index
    %c0_89 = arith.constant 0 : index
    %139 = vector.load %arg12[%c0_87, %c0_88, %c0_89] : memref<2x32x64xf32, #tpu.memory_space<vmem>>, vector<1x32x64xf32>
    %140 = vector.shape_cast %139 : vector<1x32x64xf32> to vector<32x64xf32>
    %c0_90 = arith.constant 0 : index
    %c0_91 = arith.constant 0 : index
    %c0_92 = arith.constant 0 : index
    %141 = vector.load %arg13[%c0_90, %c0_91, %c0_92] : memref<2x1x64xf32, #tpu.memory_space<vmem>>, vector<1x1x64xf32>
    %142 = vector.shape_cast %141 : vector<1x1x64xf32> to vector<1x64xf32>
    %c0_93 = arith.constant 0 : index
    %c0_94 = arith.constant 0 : index
    %c0_95 = arith.constant 0 : index
    %143 = vector.load %arg14[%c0_93, %c0_94, %c0_95] : memref<2x64x32xf32, #tpu.memory_space<vmem>>, vector<1x64x32xf32>
    %144 = vector.shape_cast %143 : vector<1x64x32xf32> to vector<64x32xf32>
    %c0_96 = arith.constant 0 : index
    %c0_97 = arith.constant 0 : index
    %c0_98 = arith.constant 0 : index
    %145 = vector.load %arg15[%c0_96, %c0_97, %c0_98] : memref<2x1x32xf32, #tpu.memory_space<vmem>>, vector<1x1x32xf32>
    %146 = vector.shape_cast %145 : vector<1x1x32xf32> to vector<1x32xf32>
    %c0_99 = arith.constant 0 : index
    %c0_100 = arith.constant 0 : index
    %c0_101 = arith.constant 0 : index
    %147 = vector.load %arg16[%c0_99, %c0_100, %c0_101] : memref<2x1x32xf32, #tpu.memory_space<vmem>>, vector<1x1x32xf32>
    %148 = vector.shape_cast %147 : vector<1x1x32xf32> to vector<1x32xf32>
    %c0_102 = arith.constant 0 : index
    %c0_103 = arith.constant 0 : index
    %c0_104 = arith.constant 0 : index
    %149 = vector.load %arg17[%c0_102, %c0_103, %c0_104] : memref<2x1x32xf32, #tpu.memory_space<vmem>>, vector<1x1x32xf32>
    %150 = vector.shape_cast %149 : vector<1x1x32xf32> to vector<1x32xf32>
    %cst_105 = arith.constant dense<0.000000e+00> : vector<2x64xf32>
    %151 = tpu.matmul %138, %140, %cst_105 {dimension_numbers = #tpu.dot_dimension_numbers<[1], [0], [0], [1], [0, 0, 1, 1], [], []>} : vector<2x32xf32>, vector<32x64xf32>, vector<2x64xf32> -> vector<2x64xf32>
    %152 = vector.broadcast %142 : vector<1x64xf32> to vector<2x64xf32>
    %153 = arith.addf %151, %152 : vector<2x64xf32>
    %cst_106 = arith.constant 0.000000e+00 : f32
    %154 = vector.broadcast %cst_106 : f32 to vector<2x64xf32>
    %155 = arith.maximumf %153, %154 : vector<2x64xf32>
    %cst_107 = arith.constant dense<0.000000e+00> : vector<2x32xf32>
    %156 = tpu.matmul %155, %144, %cst_107 {dimension_numbers = #tpu.dot_dimension_numbers<[1], [0], [0], [1], [0, 0, 1, 1], [], []>} : vector<2x64xf32>, vector<64x32xf32>, vector<2x32xf32> -> vector<2x32xf32>
    %157 = vector.broadcast %146 : vector<1x32xf32> to vector<2x32xf32>
    %158 = arith.addf %156, %157 : vector<2x32xf32>
    %159 = arith.addf %158, %138 : vector<2x32xf32>
    %cst_108 = arith.constant dense<0.000000e+00> : vector<2xf32>
    %160 = vector.multi_reduction <add>, %159, %cst_108 [1] : vector<2x32xf32> to vector<2xf32>
    %161 = vector.shape_cast %160 : vector<2xf32> to vector<2x1xf32>
    %cst_109 = arith.constant 3.200000e+01 : f32
    %162 = vector.broadcast %cst_109 : f32 to vector<2x1xf32>
    %163 = arith.divf %161, %162 : vector<2x1xf32>
    %164 = arith.mulf %159, %159 : vector<2x32xf32>
    %cst_110 = arith.constant dense<0.000000e+00> : vector<2xf32>
    %165 = vector.multi_reduction <add>, %164, %cst_110 [1] : vector<2x32xf32> to vector<2xf32>
    %166 = vector.shape_cast %165 : vector<2xf32> to vector<2x1xf32>
    %cst_111 = arith.constant 3.200000e+01 : f32
    %167 = vector.broadcast %cst_111 : f32 to vector<2x1xf32>
    %168 = arith.divf %166, %167 : vector<2x1xf32>
    %169 = arith.mulf %163, %163 : vector<2x1xf32>
    %170 = arith.subf %168, %169 : vector<2x1xf32>
    %171 = vector.broadcast %163 : vector<2x1xf32> to vector<2x32xf32>
    %172 = arith.subf %159, %171 : vector<2x32xf32>
    %cst_112 = arith.constant 9.99999974E-6 : f32
    %173 = vector.broadcast %cst_112 : f32 to vector<2x1xf32>
    %174 = arith.addf %170, %173 : vector<2x1xf32>
    %175 = math.rsqrt %174 : vector<2x1xf32>
    %176 = vector.broadcast %175 : vector<2x1xf32> to vector<2x32xf32>
    %177 = arith.mulf %172, %176 : vector<2x32xf32>
    %178 = vector.broadcast %148 : vector<1x32xf32> to vector<2x32xf32>
    %179 = arith.mulf %177, %178 : vector<2x32xf32>
    %180 = vector.broadcast %150 : vector<1x32xf32> to vector<2x32xf32>
    %181 = arith.addf %179, %180 : vector<2x32xf32>
    %c1_113 = arith.constant 1 : index
    %c0_114 = arith.constant 0 : index
    %c0_115 = arith.constant 0 : index
    %182 = vector.load %arg12[%c1_113, %c0_114, %c0_115] : memref<2x32x64xf32, #tpu.memory_space<vmem>>, vector<1x32x64xf32>
    %183 = vector.shape_cast %182 : vector<1x32x64xf32> to vector<32x64xf32>
    %c1_116 = arith.constant 1 : index
    %c0_117 = arith.constant 0 : index
    %c0_118 = arith.constant 0 : index
    %184 = vector.load %arg13[%c1_116, %c0_117, %c0_118] : memref<2x1x64xf32, #tpu.memory_space<vmem>>, vector<1x1x64xf32>
    %185 = vector.shape_cast %184 : vector<1x1x64xf32> to vector<1x64xf32>
    %c1_119 = arith.constant 1 : index
    %c0_120 = arith.constant 0 : index
    %c0_121 = arith.constant 0 : index
    %186 = vector.load %arg14[%c1_119, %c0_120, %c0_121] : memref<2x64x32xf32, #tpu.memory_space<vmem>>, vector<1x64x32xf32>
    %187 = vector.shape_cast %186 : vector<1x64x32xf32> to vector<64x32xf32>
    %c1_122 = arith.constant 1 : index
    %c0_123 = arith.constant 0 : index
    %c0_124 = arith.constant 0 : index
    %188 = vector.load %arg15[%c1_122, %c0_123, %c0_124] : memref<2x1x32xf32, #tpu.memory_space<vmem>>, vector<1x1x32xf32>
    %189 = vector.shape_cast %188 : vector<1x1x32xf32> to vector<1x32xf32>
    %c1_125 = arith.constant 1 : index
    %c0_126 = arith.constant 0 : index
    %c0_127 = arith.constant 0 : index
    %190 = vector.load %arg16[%c1_125, %c0_126, %c0_127] : memref<2x1x32xf32, #tpu.memory_space<vmem>>, vector<1x1x32xf32>
    %191 = vector.shape_cast %190 : vector<1x1x32xf32> to vector<1x32xf32>
    %c1_128 = arith.constant 1 : index
    %c0_129 = arith.constant 0 : index
    %c0_130 = arith.constant 0 : index
    %192 = vector.load %arg17[%c1_128, %c0_129, %c0_130] : memref<2x1x32xf32, #tpu.memory_space<vmem>>, vector<1x1x32xf32>
    %193 = vector.shape_cast %192 : vector<1x1x32xf32> to vector<1x32xf32>
    %cst_131 = arith.constant dense<0.000000e+00> : vector<2x64xf32>
    %194 = tpu.matmul %181, %183, %cst_131 {dimension_numbers = #tpu.dot_dimension_numbers<[1], [0], [0], [1], [0, 0, 1, 1], [], []>} : vector<2x32xf32>, vector<32x64xf32>, vector<2x64xf32> -> vector<2x64xf32>
    %195 = vector.broadcast %185 : vector<1x64xf32> to vector<2x64xf32>
    %196 = arith.addf %194, %195 : vector<2x64xf32>
    %cst_132 = arith.constant 0.000000e+00 : f32
    %197 = vector.broadcast %cst_132 : f32 to vector<2x64xf32>
    %198 = arith.maximumf %196, %197 : vector<2x64xf32>
    %cst_133 = arith.constant dense<0.000000e+00> : vector<2x32xf32>
    %199 = tpu.matmul %198, %187, %cst_133 {dimension_numbers = #tpu.dot_dimension_numbers<[1], [0], [0], [1], [0, 0, 1, 1], [], []>} : vector<2x64xf32>, vector<64x32xf32>, vector<2x32xf32> -> vector<2x32xf32>
    %200 = vector.broadcast %189 : vector<1x32xf32> to vector<2x32xf32>
    %201 = arith.addf %199, %200 : vector<2x32xf32>
    %202 = arith.addf %201, %181 : vector<2x32xf32>
    %cst_134 = arith.constant dense<0.000000e+00> : vector<2xf32>
    %203 = vector.multi_reduction <add>, %202, %cst_134 [1] : vector<2x32xf32> to vector<2xf32>
    %204 = vector.shape_cast %203 : vector<2xf32> to vector<2x1xf32>
    %cst_135 = arith.constant 3.200000e+01 : f32
    %205 = vector.broadcast %cst_135 : f32 to vector<2x1xf32>
    %206 = arith.divf %204, %205 : vector<2x1xf32>
    %207 = arith.mulf %202, %202 : vector<2x32xf32>
    %cst_136 = arith.constant dense<0.000000e+00> : vector<2xf32>
    %208 = vector.multi_reduction <add>, %207, %cst_136 [1] : vector<2x32xf32> to vector<2xf32>
    %209 = vector.shape_cast %208 : vector<2xf32> to vector<2x1xf32>
    %cst_137 = arith.constant 3.200000e+01 : f32
    %210 = vector.broadcast %cst_137 : f32 to vector<2x1xf32>
    %211 = arith.divf %209, %210 : vector<2x1xf32>
    %212 = arith.mulf %206, %206 : vector<2x1xf32>
    %213 = arith.subf %211, %212 : vector<2x1xf32>
    %214 = vector.broadcast %206 : vector<2x1xf32> to vector<2x32xf32>
    %215 = arith.subf %202, %214 : vector<2x32xf32>
    %cst_138 = arith.constant 9.99999974E-6 : f32
    %216 = vector.broadcast %cst_138 : f32 to vector<2x1xf32>
    %217 = arith.addf %213, %216 : vector<2x1xf32>
    %218 = math.rsqrt %217 : vector<2x1xf32>
    %219 = vector.broadcast %218 : vector<2x1xf32> to vector<2x32xf32>
    %220 = arith.mulf %215, %219 : vector<2x32xf32>
    %221 = vector.broadcast %191 : vector<1x32xf32> to vector<2x32xf32>
    %222 = arith.mulf %220, %221 : vector<2x32xf32>
    %223 = vector.broadcast %193 : vector<1x32xf32> to vector<2x32xf32>
    %224 = arith.addf %222, %223 : vector<2x32xf32>
    %cst_139 = arith.constant 0.000000e+00 : f32
    %225 = vector.broadcast %cst_139 : f32 to vector<2x32xf32>
    %226 = arith.maximumf %224, %225 : vector<2x32xf32>
    %c0_140 = arith.constant 0 : index
    %c0_141 = arith.constant 0 : index
    %227 = vector.load %arg18[%c0_140, %c0_141] : memref<32x1xf32, #tpu.memory_space<vmem>>, vector<32x1xf32>
    %cst_142 = arith.constant dense<0.000000e+00> : vector<2x1xf32>
    %228 = tpu.matmul %226, %227, %cst_142 {dimension_numbers = #tpu.dot_dimension_numbers<[1], [0], [0], [1], [0, 0, 1, 1], [], []>} : vector<2x32xf32>, vector<32x1xf32>, vector<2x1xf32> -> vector<2x1xf32>
    %c0_143 = arith.constant 0 : index
    %c0_144 = arith.constant 0 : index
    %229 = vector.load %arg19[%c0_143, %c0_144] : memref<1x1xf32, #tpu.memory_space<vmem>>, vector<1x1xf32>
    %230 = vector.broadcast %229 : vector<1x1xf32> to vector<2x1xf32>
    %231 = arith.addf %228, %230 : vector<2x1xf32>
    %c0_145 = arith.constant 0 : index
    %c0_146 = arith.constant 0 : index
    %232 = vector.load %arg20[%c0_145, %c0_146] : memref<2x1xf32, #tpu.memory_space<vmem>>, vector<2x1xf32>
    tpu.vector_store %arg20[%c0_145, %c0_146], %231 {strides = array<i32>} : memref<2x1xf32, #tpu.memory_space<vmem>>, vector<2x1xf32>,
    return
  }
}

</mosaic_0001>

<llo_original>
// kernel: model_forward.1
$region0: #{model_forward.1}
  #allocation0 [shape = 'u32[]', space=smem, size = 0x4, offset = 0x4, fixed_abs, tag = 'smem constant byte address 0x4 - core index']
  #allocation1 [shape = 'u32[144,128]{1,0:T(1,128)}', space=vmem, size = 0x12000, scoped, tag = 'internal scratch']
  #allocation2 [shape = 'f32[1,1]{1,0:T(1,128)S(1)}', space=vmem, size = 0x200, scoped, tag = 'scoped memory for model_forward.1']
  %s0 = inlined_call_operand.vmem [shape: f32[16,64], index: 0, kind: input, shape index: {}]
  %s1 = inlined_call_operand.vmem [shape: f32[16,1], index: 1, kind: input, shape index: {}]
  %s2 = inlined_call_operand.vmem [shape: f32[64,32], index: 2, kind: input, shape index: {}]
  %s3 = inlined_call_operand.vmem [shape: f32[1,32], index: 3, kind: input, shape index: {}]
  %s4 = inlined_call_operand.vmem [shape: f32[2,32,64], index: 4, kind: input, shape index: {}]
  %s5 = inlined_call_operand.vmem [shape: f32[2,1,64], index: 5, kind: input, shape index: {}]
  %s6 = inlined_call_operand.vmem [shape: f32[2,64,32], index: 6, kind: input, shape index: {}]
  %s7 = inlined_call_operand.vmem [shape: f32[2,1,32], index: 7, kind: input, shape index: {}]
  %s8 = inlined_call_operand.vmem [shape: f32[2,1,32], index: 8, kind: input, shape index: {}]
  %s9 = inlined_call_operand.vmem [shape: f32[2,1,32], index: 9, kind: input, shape index: {}]
  %s10 = inlined_call_operand.vmem [shape: f32[8,32,32], index: 10, kind: input, shape index: {}]
  %s11 = inlined_call_operand.vmem [shape: f32[1,32], index: 11, kind: input, shape index: {}]
  %s12 = inlined_call_operand.vmem [shape: f32[2,32,64], index: 12, kind: input, shape index: {}]
  %s13 = inlined_call_operand.vmem [shape: f32[2,1,64], index: 13, kind: input, shape index: {}]
  %s14 = inlined_call_operand.vmem [shape: f32[2,64,32], index: 14, kind: input, shape index: {}]
  %s15 = inlined_call_operand.vmem [shape: f32[2,1,32], index: 15, kind: input, shape index: {}]
  %s16 = inlined_call_operand.vmem [shape: f32[2,1,32], index: 16, kind: input, shape index: {}]
  %s17 = inlined_call_operand.vmem [shape: f32[2,1,32], index: 17, kind: input, shape index: {}]
  %s18 = inlined_call_operand.vmem [shape: f32[32,1], index: 18, kind: input, shape index: {}]
  %s19 = inlined_call_operand.<no memory space> [shape: f32[1,1], index: 19, kind: input, shape index: {}]
  %s20 = inlined_call_operand.vmem [shape: f32[2,1], index: 20, kind: output, shape index: {}]
  %s21 = sld [smem:[#allocation0]]
  $region90: #{model_forward.1} parent=0
    _
  %s23 = ssub.s32 1, %s21
  %s24 = scalar_select 0, %s23, %s21
  %v25 = vstv %s19
  %26 = vst [vmem:[#allocation2] sm:$0x1] %v25
  // Predicated region
  $region2: #{model_forward.1} parent=0 // pred_check
    _
  $region3: #{model_forward.1} parent=0 // pred_check_branch
    %28 = sbr.rel (0) target = $region5
  $region4: #{model_forward.1} parent=0 // pred_region
    _
  $region5: #{model_forward.1} parent=0 // pred_fallthru
    _
  // Predicated region
  $region6: #{model_forward.1} parent=0 // pred_check
    _
  $region7: #{model_forward.1} parent=0 // pred_check_branch
    %30 = sbr.rel (0) target = $region9
  $region8: #{model_forward.1} parent=0 // pred_region
    _
  $region9: #{model_forward.1} parent=0 // pred_fallthru
    _
  // Predicated region
  $region10: #{model_forward.1} parent=0 // pred_check
    _
  $region11: #{model_forward.1} parent=0 // pred_check_branch
    %32 = sbr.rel (0) target = $region13
  $region12: #{model_forward.1} parent=0 // pred_region
    _
  $region13: #{model_forward.1} parent=0 // pred_fallthru
    _
  // Predicated region
  $region14: #{model_forward.1} parent=0 // pred_check
    _
  $region15: #{model_forward.1} parent=0 // pred_check_branch
    %34 = sbr.rel (0) target = $region17
  $region16: #{model_forward.1} parent=0 // pred_region
    _
  $region17: #{model_forward.1} parent=0 // pred_fallthru
    _
  // Predicated region
  $region18: #{model_forward.1} parent=0 // pred_check
    _
  $region19: #{model_forward.1} parent=0 // pred_check_branch
    %36 = sbr.rel (0) target = $region21
  $region20: #{model_forward.1} parent=0 // pred_region
    _
  $region21: #{model_forward.1} parent=0 // pred_fallthru
    _
  // Predicated region
  $region22: #{model_forward.1} parent=0 // pred_check
    _
  $region23: #{model_forward.1} parent=0 // pred_check_branch
    %38 = sbr.rel (0) target = $region25
  $region24: #{model_forward.1} parent=0 // pred_region
    _
  $region25: #{model_forward.1} parent=0 // pred_fallthru
    _
  // Predicated region
  $region26: #{model_forward.1} parent=0 // pred_check
    _
  $region27: #{model_forward.1} parent=0 // pred_check_branch
    %40 = sbr.rel (0) target = $region29
  $region28: #{model_forward.1} parent=0 // pred_region
    _
  $region29: #{model_forward.1} parent=0 // pred_fallthru
    _
  // Predicated region
  $region30: #{model_forward.1} parent=0 // pred_check
    _
  $region31: #{model_forward.1} parent=0 // pred_check_branch
    %42 = sbr.rel (0) target = $region33
  $region32: #{model_forward.1} parent=0 // pred_region
    _
  $region33: #{model_forward.1} parent=0 // pred_fallthru
    _
  // Predicated region
  $region34: #{model_forward.1} parent=0 // pred_check
    _
  $region35: #{model_forward.1} parent=0 // pred_check_branch
    %44 = sbr.rel (0) target = $region37
  $region36: #{model_forward.1} parent=0 // pred_region
    _
  $region37: #{model_forward.1} parent=0 // pred_fallthru
    _
  // Predicated region
  $region38: #{model_forward.1} parent=0 // pred_check
    _
  $region39: #{model_forward.1} parent=0 // pred_check_branch
    %46 = sbr.rel (0) target = $region41
  $region40: #{model_forward.1} parent=0 // pred_region
    _
  $region41: #{model_forward.1} parent=0 // pred_fallthru
    _
  // Predicated region
  $region42: #{model_forward.1} parent=0 // pred_check
    _
  $region43: #{model_forward.1} parent=0 // pred_check_branch
    %48 = sbr.rel (0) target = $region45
  $region44: #{model_forward.1} parent=0 // pred_region
    _
  $region45: #{model_forward.1} parent=0 // pred_fallthru
    _
  // Predicated region
  $region46: #{model_forward.1} parent=0 // pred_check
    _
  $region47: #{model_forward.1} parent=0 // pred_check_branch
    %50 = sbr.rel (0) target = $region49
  $region48: #{model_forward.1} parent=0 // pred_region
    _
  $region49: #{model_forward.1} parent=0 // pred_fallthru
    _
  // Predicated region
  $region50: #{model_forward.1} parent=0 // pred_check
    _
  $region51: #{model_forward.1} parent=0 // pred_check_branch
    %52 = sbr.rel (0) target = $region53
  $region52: #{model_forward.1} parent=0 // pred_region
    _
  $region53: #{model_forward.1} parent=0 // pred_fallthru
    _
  // Predicated region
  $region54: #{model_forward.1} parent=0 // pred_check
    _
  $region55: #{model_forward.1} parent=0 // pred_check_branch
    %54 = sbr.rel (0) target = $region57
  $region56: #{model_forward.1} parent=0 // pred_region
    _
  $region57: #{model_forward.1} parent=0 // pred_fallthru
    _
  // Predicated region
  $region58: #{model_forward.1} parent=0 // pred_check
    _
  $region59: #{model_forward.1} parent=0 // pred_check_branch
    %56 = sbr.rel (0) target = $region61
  $region60: #{model_forward.1} parent=0 // pred_region
    _
  $region61: #{model_forward.1} parent=0 // pred_fallthru
    _
  // Predicated region
  $region62: #{model_forward.1} parent=0 // pred_check
    _
  $region63: #{model_forward.1} parent=0 // pred_check_branch
    %58 = sbr.rel (0) target = $region65
  $region64: #{model_forward.1} parent=0 // pred_region
    _
  $region65: #{model_forward.1} parent=0 // pred_fallthru
    _
  // Predicated region
  $region66: #{model_forward.1} parent=0 // pred_check
    _
  $region67: #{model_forward.1} parent=0 // pred_check_branch
    %60 = sbr.rel (0) target = $region69
  $region68: #{model_forward.1} parent=0 // pred_region
    _
  $region69: #{model_forward.1} parent=0 // pred_fallthru
    _
  // Predicated region
  $region70: #{model_forward.1} parent=0 // pred_check
    _
  $region71: #{model_forward.1} parent=0 // pred_check_branch
    %62 = sbr.rel (0) target = $region73
  $region72: #{model_forward.1} parent=0 // pred_region
    _
  $region73: #{model_forward.1} parent=0 // pred_fallthru
    _
  // Predicated region
  $region74: #{model_forward.1} parent=0 // pred_check
    _
  $region75: #{model_forward.1} parent=0 // pred_check_branch
    %64 = sbr.rel (0) target = $region77
  $region76: #{model_forward.1} parent=0 // pred_region
    _
  $region77: #{model_forward.1} parent=0 // pred_fallthru
    _
  // Predicated region
  $region78: #{model_forward.1} parent=0 // pred_check
    _
  $region79: #{model_forward.1} parent=0 // pred_check_branch
    %66 = sbr.rel (0) target = $region81
  $region80: #{model_forward.1} parent=0 // pred_region
    _
  $region81: #{model_forward.1} parent=0 // pred_fallthru
    _
  %v67 = vld [vmem:[%s0] sm:$0xff]
  %v68 = vld [vmem:[%s0 + $0x8] sm:$0xff]
  %v69 = vld [vmem:[%s1] sm:$0xff]
  %v70 = vld [vmem:[%s1 + $0x8] sm:$0xff]
  %72 = vset.pattern.permute.xlu0 0
  %73 = vperm.xlu0 %72, %v69
  %v74 = vpop.permute.xlu0 %73
  %77 = vset.pattern.permute.xlu0 0
  %78 = vperm.xlu0 %77, %v70
  %v79 = vpop.permute.xlu0 %78
  %v81 = vmul.f32 %v67, %v74
  %v82 = vmul.f32 %v68, %v79
  %v83 = vld [vmem:[%s2] sm:$0xff]
  %v84 = vld [vmem:[%s2 + $0x8] sm:$0xff]
  %v85 = vld [vmem:[%s2 + $0x10] sm:$0xff]
  %v86 = vld [vmem:[%s2 + $0x18] sm:$0xff]
  %v87 = vld [vmem:[%s2 + $0x20] sm:$0xff]
  %v88 = vld [vmem:[%s2 + $0x28] sm:$0xff]
  %v89 = vld [vmem:[%s2 + $0x30] sm:$0xff]
  %v90 = vld [vmem:[%s2 + $0x38] sm:$0xff]
  %v91 = vld [vmem:[%s3] sm:$0x1]
  %v93 = vlaneseq
  %v94 = vshrl.u32 %v93, 7
  %v95 = vsub.s32 0, %v94
  %v96 = vrot.slane %v91, %v95
  %vm98 = vcmask 523264
  %v100 = vsel %vm98, %v81, 0
  %v103 = vsel %vm98, %v82, 0
  %105 = vmatprep.subr.mxu0 0.0
  %106 = vmatpush1.msra.mxu0 0.0
  %107 = vmatprep.subr.mxu0 0.0
  %108 = vmatpush1.msra.mxu0 0.0
  %109 = vmatprep.subr.mxu0 0.0
  %110 = vmatpush1.msra.mxu0 0.0
  %111 = vmatprep.subr.mxu0 0.0
  %112 = vmatpush1.msra.mxu0 0.0
  %113 = vmatprep.subr.mxu0 0.0
  %114 = vmatpush1.msra.mxu0 0.0
  %115 = vmatprep.subr.mxu0 0.0
  %116 = vmatpush1.msra.mxu0 0.0
  %117 = vmatprep.subr.mxu0 0.0
  %118 = vmatpush1.msra.mxu0 0.0
  %119 = vmatprep.subr.mxu0 0.0
  %120 = vmatpush1.msra.mxu0 0.0
  %121 = vmatprep.subr.mxu0 0.0
  %122 = vmatpush1.msra.mxu0 %v90
  %123 = vmatprep.subr.mxu0 0.0
  %124 = vmatpush1.msra.mxu0 %v89
  %125 = vmatprep.subr.mxu0 0.0
  %126 = vmatpush1.msra.mxu0 %v88
  %127 = vmatprep.subr.mxu0 0.0
  %128 = vmatpush1.msra.mxu0 %v87
  %129 = vmatprep.subr.mxu0 0.0
  %130 = vmatpush1.msra.mxu0 %v86
  %131 = vmatprep.subr.mxu0 0.0
  %132 = vmatpush1.msra.mxu0 %v85
  %133 = vmatprep.subr.mxu0 0.0
  %134 = vmatpush1.msra.mxu0 %v84
  %135 = vmatprep.subr.mxu0 0.0
  %136 = vmatpush1.msra.mxu0 %v83
  %137 = vmatprep.subr.mxu0 0.0
  %138 = vmatpush2.msra.mxu0 0.0
  %139 = vmatprep.subr.mxu0 0.0
  %140 = vmatpush2.msra.mxu0 0.0
  %141 = vmatprep.subr.mxu0 0.0
  %142 = vmatpush2.msra.mxu0 0.0
  %143 = vmatprep.subr.mxu0 0.0
  %144 = vmatpush2.msra.mxu0 0.0
  %145 = vmatprep.subr.mxu0 0.0
  %146 = vmatpush2.msra.mxu0 0.0
  %147 = vmatprep.subr.mxu0 0.0
  %148 = vmatpush2.msra.mxu0 0.0
  %149 = vmatprep.subr.mxu0 0.0
  %150 = vmatpush2.msra.mxu0 0.0
  %151 = vmatprep.subr.mxu0 0.0
  %152 = vmatpush2.msra.mxu0 0.0
  %153 = vmatprep.subr.mxu0 0.0
  %154 = vmatpush2.msra.mxu0 0.0
  %155 = vmatprep.subr.mxu0 0.0
  %156 = vmatpush2.msra.mxu0 0.0
  %157 = vmatprep.subr.mxu0 0.0
  %158 = vmatpush2.msra.mxu0 0.0
  %159 = vmatprep.subr.mxu0 0.0
  %160 = vmatpush2.msra.mxu0 0.0
  %161 = vmatprep.subr.mxu0 0.0
  %162 = vmatpush2.msra.mxu0 0.0
  %163 = vmatprep.subr.mxu0 0.0
  %164 = vmatpush2.msra.mxu0 0.0
  %165 = vmatprep.subr.mxu0 0.0
  %166 = vmatpush2.msra.mxu0 0.0
  %167 = vmatprep.subr.mxu0 0.0
  %168 = vmatpush2.msra.mxu0 0.0
  %169 = vmatprep.mubr.f32.mxu0 0.0
  %170 = vmatmul.mubr.f32.gmra.mxu0 %v100
  %v171 = vpop.f32.mrf.mxu0
  %v172 = vadd.f32 %v96, %v171
  %v173 = vpop.f32.mrf.mxu0
  %174 = vmatprep.mubr.f32.mxu0 0.0
  %175 = vmatmul.mubr.f32.gmra.mxu0 %v103
  %v176 = vpop.f32.mrf.mxu0
  %v177 = vadd.f32 %v96, %v176
  %v178 = vpop.f32.mrf.mxu0
  %179 = vdwg.mxu0
  %v180 = vld [vmem:[%s4] sm:$0xff]
  %v181 = vld [vmem:[%s4 + $0x8] sm:$0xff]
  %v182 = vld [vmem:[%s4 + $0x10] sm:$0xff]
  %v183 = vld [vmem:[%s4 + $0x18] sm:$0xff]
  %v184 = vld [vmem:[%s5] sm:$0x1]
  %v185 = vld [vmem:[%s6] sm:$0xff]
  %v186 = vld [vmem:[%s6 + $0x8] sm:$0xff]
  %v187 = vld [vmem:[%s6 + $0x10] sm:$0xff]
  %v188 = vld [vmem:[%s6 + $0x18] sm:$0xff]
  %v189 = vld [vmem:[%s6 + $0x20] sm:$0xff]
  %v190 = vld [vmem:[%s6 + $0x28] sm:$0xff]
  %v191 = vld [vmem:[%s6 + $0x30] sm:$0xff]
  %v192 = vld [vmem:[%s6 + $0x38] sm:$0xff]
  %v193 = vld [vmem:[%s7] sm:$0x1]
  %v194 = vld [vmem:[%s8] sm:$0x1]
  %v195 = vld [vmem:[%s9] sm:$0x1]
  %v197 = vlaneseq
  %v198 = vshrl.u32 %v197, 7
  %v199 = vsub.s32 0, %v198
  %v200 = vrot.slane %v184, %v199
  %vm202 = vcmask 261120
  %v204 = vsel %vm202, %v172, 0
  %v207 = vsel %vm202, %v177, 0
  %209 = vmatprep.subr.mxu0 0.0
  %210 = vmatpush1.msra.mxu0 0.0
  %211 = vmatprep.subr.mxu0 0.0
  %212 = vmatpush1.msra.mxu0 0.0
  %213 = vmatprep.subr.mxu0 0.0
  %214 = vmatpush1.msra.mxu0 0.0
  %215 = vmatprep.subr.mxu0 0.0
  %216 = vmatpush1.msra.mxu0 0.0
  %217 = vmatprep.subr.mxu0 0.0
  %218 = vmatpush1.msra.mxu0 0.0
  %219 = vmatprep.subr.mxu0 0.0
  %220 = vmatpush1.msra.mxu0 0.0
  %221 = vmatprep.subr.mxu0 0.0
  %222 = vmatpush1.msra.mxu0 0.0
  %223 = vmatprep.subr.mxu0 0.0
  %224 = vmatpush1.msra.mxu0 0.0
  %225 = vmatprep.subr.mxu0 0.0
  %226 = vmatpush1.msra.mxu0 0.0
  %227 = vmatprep.subr.mxu0 0.0
  %228 = vmatpush1.msra.mxu0 0.0
  %229 = vmatprep.subr.mxu0 0.0
  %230 = vmatpush1.msra.mxu0 0.0
  %231 = vmatprep.subr.mxu0 0.0
  %232 = vmatpush1.msra.mxu0 0.0
  %233 = vmatprep.subr.mxu0 0.0
  %234 = vmatpush1.msra.mxu0 %v183
  %235 = vmatprep.subr.mxu0 0.0
  %236 = vmatpush1.msra.mxu0 %v182
  %237 = vmatprep.subr.mxu0 0.0
  %238 = vmatpush1.msra.mxu0 %v181
  %239 = vmatprep.subr.mxu0 0.0
  %240 = vmatpush1.msra.mxu0 %v180
  %241 = vmatprep.subr.mxu0 0.0
  %242 = vmatpush2.msra.mxu0 0.0
  %243 = vmatprep.subr.mxu0 0.0
  %244 = vmatpush2.msra.mxu0 0.0
  %245 = vmatprep.subr.mxu0 0.0
  %246 = vmatpush2.msra.mxu0 0.0
  %247 = vmatprep.subr.mxu0 0.0
  %248 = vmatpush2.msra.mxu0 0.0
  %249 = vmatprep.subr.mxu0 0.0
  %250 = vmatpush2.msra.mxu0 0.0
  %251 = vmatprep.subr.mxu0 0.0
  %252 = vmatpush2.msra.mxu0 0.0
  %253 = vmatprep.subr.mxu0 0.0
  %254 = vmatpush2.msra.mxu0 0.0
  %255 = vmatprep.subr.mxu0 0.0
  %256 = vmatpush2.msra.mxu0 0.0
  %257 = vmatprep.subr.mxu0 0.0
  %258 = vmatpush2.msra.mxu0 0.0
  %259 = vmatprep.subr.mxu0 0.0
  %260 = vmatpush2.msra.mxu0 0.0
  %261 = vmatprep.subr.mxu0 0.0
  %262 = vmatpush2.msra.mxu0 0.0
  %263 = vmatprep.subr.mxu0 0.0
  %264 = vmatpush2.msra.mxu0 0.0
  %265 = vmatprep.subr.mxu0 0.0
  %266 = vmatpush2.msra.mxu0 0.0
  %267 = vmatprep.subr.mxu0 0.0
  %268 = vmatpush2.msra.mxu0 0.0
  %269 = vmatprep.subr.mxu0 0.0
  %270 = vmatpush2.msra.mxu0 0.0
  %271 = vmatprep.subr.mxu0 0.0
  %272 = vmatpush2.msra.mxu0 0.0
  %273 = vmatprep.mubr.f32.mxu0 0.0
  %274 = vmatmul.mubr.f32.gmra.mxu0 %v204
  %v275 = vpop.f32.mrf.mxu0
  %v276 = vadd.f32 %v200, %v275
  %v277 = vpop.f32.mrf.mxu0
  %278 = vmatprep.mubr.f32.mxu0 0.0
  %279 = vmatmul.mubr.f32.gmra.mxu0 %v207
  %v280 = vpop.f32.mrf.mxu0
  %v281 = vadd.f32 %v200, %v280
  %v282 = vpop.f32.mrf.mxu0
  %283 = vdwg.mxu0
  %v284 = vmax.f32 %v276, 0.0
  %v285 = vmax.f32 %v281, 0.0
  %v287 = vlaneseq
  %v288 = vshrl.u32 %v287, 7
  %v289 = vsub.s32 0, %v288
  %v290 = vrot.slane %v193, %v289
  %v293 = vsel %vm98, %v284, 0
  %v296 = vsel %vm98, %v285, 0
  %298 = vmatprep.subr.mxu0 0.0
  %299 = vmatpush1.msra.mxu0 0.0
  %300 = vmatprep.subr.mxu0 0.0
  %301 = vmatpush1.msra.mxu0 0.0
  %302 = vmatprep.subr.mxu0 0.0
  %303 = vmatpush1.msra.mxu0 0.0
  %304 = vmatprep.subr.mxu0 0.0
  %305 = vmatpush1.msra.mxu0 0.0
  %306 = vmatprep.subr.mxu0 0.0
  %307 = vmatpush1.msra.mxu0 0.0
  %308 = vmatprep.subr.mxu0 0.0
  %309 = vmatpush1.msra.mxu0 0.0
  %310 = vmatprep.subr.mxu0 0.0
  %311 = vmatpush1.msra.mxu0 0.0
  %312 = vmatprep.subr.mxu0 0.0
  %313 = vmatpush1.msra.mxu0 0.0
  %314 = vmatprep.subr.mxu0 0.0
  %315 = vmatpush1.msra.mxu0 %v192
  %316 = vmatprep.subr.mxu0 0.0
  %317 = vmatpush1.msra.mxu0 %v191
  %318 = vmatprep.subr.mxu0 0.0
  %319 = vmatpush1.msra.mxu0 %v190
  %320 = vmatprep.subr.mxu0 0.0
  %321 = vmatpush1.msra.mxu0 %v189
  %322 = vmatprep.subr.mxu0 0.0
  %323 = vmatpush1.msra.mxu0 %v188
  %324 = vmatprep.subr.mxu0 0.0
  %325 = vmatpush1.msra.mxu0 %v187
  %326 = vmatprep.subr.mxu0 0.0
  %327 = vmatpush1.msra.mxu0 %v186
  %328 = vmatprep.subr.mxu0 0.0
  %329 = vmatpush1.msra.mxu0 %v185
  %330 = vmatprep.subr.mxu0 0.0
  %331 = vmatpush2.msra.mxu0 0.0
  %332 = vmatprep.subr.mxu0 0.0
  %333 = vmatpush2.msra.mxu0 0.0
  %334 = vmatprep.subr.mxu0 0.0
  %335 = vmatpush2.msra.mxu0 0.0
  %336 = vmatprep.subr.mxu0 0.0
  %337 = vmatpush2.msra.mxu0 0.0
  %338 = vmatprep.subr.mxu0 0.0
  %339 = vmatpush2.msra.mxu0 0.0
  %340 = vmatprep.subr.mxu0 0.0
  %341 = vmatpush2.msra.mxu0 0.0
  %342 = vmatprep.subr.mxu0 0.0
  %343 = vmatpush2.msra.mxu0 0.0
  %344 = vmatprep.subr.mxu0 0.0
  %345 = vmatpush2.msra.mxu0 0.0
  %346 = vmatprep.subr.mxu0 0.0
  %347 = vmatpush2.msra.mxu0 0.0
  %348 = vmatprep.subr.mxu0 0.0
  %349 = vmatpush2.msra.mxu0 0.0
  %350 = vmatprep.subr.mxu0 0.0
  %351 = vmatpush2.msra.mxu0 0.0
  %352 = vmatprep.subr.mxu0 0.0
  %353 = vmatpush2.msra.mxu0 0.0
  %354 = vmatprep.subr.mxu0 0.0
  %355 = vmatpush2.msra.mxu0 0.0
  %356 = vmatprep.subr.mxu0 0.0
  %357 = vmatpush2.msra.mxu0 0.0
  %358 = vmatprep.subr.mxu0 0.0
  %359 = vmatpush2.msra.mxu0 0.0
  %360 = vmatprep.subr.mxu0 0.0
  %361 = vmatpush2.msra.mxu0 0.0
  %362 = vmatprep.mubr.f32.mxu0 0.0
  %363 = vmatmul.mubr.f32.gmra.mxu0 %v293
  %v364 = vpop.f32.mrf.mxu0
  %v365 = vadd.f32 %v290, %v364
  %v366 = vpop.f32.mrf.mxu0
  %367 = vmatprep.mubr.f32.mxu0 0.0
  %368 = vmatmul.mubr.f32.gmra.mxu0 %v296
  %v369 = vpop.f32.mrf.mxu0
  %v370 = vadd.f32 %v290, %v369
  %v371 = vpop.f32.mrf.mxu0
  %372 = vdwg.mxu0
  %v373 = vadd.f32 %v365, %v172
  %v374 = vadd.f32 %v370, %v177
  %v375 = vsel %vm202, %v373, 0.0
  %376 = vadd.xlane.f32.xlu0 %v375
  %v377 = vpop.xlane.xlu0 %376
  %v378 = vsel %vm202, %v374, 0.0
  %379 = vadd.xlane.f32.xlu0 %v378
  %v380 = vpop.xlane.xlu0 %379
  %v381 = vrcp.pop 32.0
  %v382 = vmul.f32 %v377, %v381
  %v383 = vmul.f32 %v380, %v381
  %v384 = vmul.f32 %v373, %v373
  %v385 = vmul.f32 %v374, %v374
  %v386 = vsel %vm202, %v384, 0.0
  %387 = vadd.xlane.f32.xlu0 %v386
  %v388 = vpop.xlane.xlu0 %387
  %v389 = vsel %vm202, %v385, 0.0
  %390 = vadd.xlane.f32.xlu0 %v389
  %v391 = vpop.xlane.xlu0 %390
  %v392 = vmul.f32 %v388, %v381
  %v393 = vmul.f32 %v391, %v381
  %v394 = vmul.f32 %v382, %v382
  %v395 = vmul.f32 %v383, %v383
  %v396 = vsub.f32 %v392, %v394
  %v397 = vsub.f32 %v393, %v395
  %v398 = vsub.f32 %v373, %v382
  %v399 = vsub.f32 %v374, %v383
  %v400 = vadd.f32 %v396, 1e-05
  %v401 = vadd.f32 %v397, 1e-05
  %v402 = vrsqrt.pop %v400
  %v403 = vrsqrt.pop %v401
  %v404 = vmul.f32 %v398, %v402
  %v405 = vmul.f32 %v399, %v403
  %v407 = vlaneseq
  %v408 = vshrl.u32 %v407, 7
  %v409 = vsub.s32 0, %v408
  %v410 = vrot.slane %v194, %v409
  %v412 = vmul.f32 %v404, %v410
  %v413 = vmul.f32 %v405, %v410
  %v415 = vlaneseq
  %v416 = vshrl.u32 %v415, 7
  %v417 = vsub.s32 0, %v416
  %v418 = vrot.slane %v195, %v417
  %v420 = vadd.f32 %v412, %v418
  %v421 = vadd.f32 %v413, %v418
  %s422 = scalar_lea.vmem %s4, 32
  %v423 = vld [vmem:[%s422] sm:$0xff]
  %v424 = vld [vmem:[%s422 + $0x8] sm:$0xff]
  %v425 = vld [vmem:[%s422 + $0x10] sm:$0xff]
  %v426 = vld [vmem:[%s422 + $0x18] sm:$0xff]
  %s427 = scalar_lea.vmem %s5, 1
  %v428 = vld [vmem:[%s427] sm:$0x1]
  %s429 = scalar_lea.vmem %s6, 64
  %v430 = vld [vmem:[%s429] sm:$0xff]
  %v431 = vld [vmem:[%s429 + $0x8] sm:$0xff]
  %v432 = vld [vmem:[%s429 + $0x10] sm:$0xff]
  %v433 = vld [vmem:[%s429 + $0x18] sm:$0xff]
  %v434 = vld [vmem:[%s429 + $0x20] sm:$0xff]
  %v435 = vld [vmem:[%s429 + $0x28] sm:$0xff]
  %v436 = vld [vmem:[%s429 + $0x30] sm:$0xff]
  %v437 = vld [vmem:[%s429 + $0x38] sm:$0xff]
  %s438 = scalar_lea.vmem %s7, 1
  %v439 = vld [vmem:[%s438] sm:$0x1]
  %s440 = scalar_lea.vmem %s8, 1
  %v441 = vld [vmem:[%s440] sm:$0x1]
  %s442 = scalar_lea.vmem %s9, 1
  %v443 = vld [vmem:[%s442] sm:$0x1]
  %v445 = vlaneseq
  %v446 = vshrl.u32 %v445, 7
  %v447 = vsub.s32 0, %v446
  %v448 = vrot.slane %v428, %v447
  %v451 = vsel %vm202, %v420, 0
  %v454 = vsel %vm202, %v421, 0
  %456 = vmatprep.subr.mxu0 0.0
  %457 = vmatpush1.msra.mxu0 0.0
  %458 = vmatprep.subr.mxu0 0.0
  %459 = vmatpush1.msra.mxu0 0.0
  %460 = vmatprep.subr.mxu0 0.0
  %461 = vmatpush1.msra.mxu0 0.0
  %462 = vmatprep.subr.mxu0 0.0
  %463 = vmatpush1.msra.mxu0 0.0
  %464 = vmatprep.subr.mxu0 0.0
  %465 = vmatpush1.msra.mxu0 0.0
  %466 = vmatprep.subr.mxu0 0.0
  %467 = vmatpush1.msra.mxu0 0.0
  %468 = vmatprep.subr.mxu0 0.0
  %469 = vmatpush1.msra.mxu0 0.0
  %470 = vmatprep.subr.mxu0 0.0
  %471 = vmatpush1.msra.mxu0 0.0
  %472 = vmatprep.subr.mxu0 0.0
  %473 = vmatpush1.msra.mxu0 0.0
  %474 = vmatprep.subr.mxu0 0.0
  %475 = vmatpush1.msra.mxu0 0.0
  %476 = vmatprep.subr.mxu0 0.0
  %477 = vmatpush1.msra.mxu0 0.0
  %478 = vmatprep.subr.mxu0 0.0
  %479 = vmatpush1.msra.mxu0 0.0
  %480 = vmatprep.subr.mxu0 0.0
  %481 = vmatpush1.msra.mxu0 %v426
  %482 = vmatprep.subr.mxu0 0.0
  %483 = vmatpush1.msra.mxu0 %v425
  %484 = vmatprep.subr.mxu0 0.0
  %485 = vmatpush1.msra.mxu0 %v424
  %486 = vmatprep.subr.mxu0 0.0
  %487 = vmatpush1.msra.mxu0 %v423
  %488 = vmatprep.subr.mxu0 0.0
  %489 = vmatpush2.msra.mxu0 0.0
  %490 = vmatprep.subr.mxu0 0.0
  %491 = vmatpush2.msra.mxu0 0.0
  %492 = vmatprep.subr.mxu0 0.0
  %493 = vmatpush2.msra.mxu0 0.0
  %494 = vmatprep.subr.mxu0 0.0
  %495 = vmatpush2.msra.mxu0 0.0
  %496 = vmatprep.subr.mxu0 0.0
  %497 = vmatpush2.msra.mxu0 0.0
  %498 = vmatprep.subr.mxu0 0.0
  %499 = vmatpush2.msra.mxu0 0.0
  %500 = vmatprep.subr.mxu0 0.0
  %501 = vmatpush2.msra.mxu0 0.0
  %502 = vmatprep.subr.mxu0 0.0
  %503 = vmatpush2.msra.mxu0 0.0
  %504 = vmatprep.subr.mxu0 0.0
  %505 = vmatpush2.msra.mxu0 0.0
  %506 = vmatprep.subr.mxu0 0.0
  %507 = vmatpush2.msra.mxu0 0.0
  %508 = vmatprep.subr.mxu0 0.0
  %509 = vmatpush2.msra.mxu0 0.0
  %510 = vmatprep.subr.mxu0 0.0
  %511 = vmatpush2.msra.mxu0 0.0
  %512 = vmatprep.subr.mxu0 0.0
  %513 = vmatpush2.msra.mxu0 0.0
  %514 = vmatprep.subr.mxu0 0.0
  %515 = vmatpush2.msra.mxu0 0.0
  %516 = vmatprep.subr.mxu0 0.0
  %517 = vmatpush2.msra.mxu0 0.0
  %518 = vmatprep.subr.mxu0 0.0
  %519 = vmatpush2.msra.mxu0 0.0
  %520 = vmatprep.mubr.f32.mxu0 0.0
  %521 = vmatmul.mubr.f32.gmra.mxu0 %v451
  %v522 = vpop.f32.mrf.mxu0
  %v523 = vadd.f32 %v448, %v522
  %v524 = vpop.f32.mrf.mxu0
  %525 = vmatprep.mubr.f32.mxu0 0.0
  %526 = vmatmul.mubr.f32.gmra.mxu0 %v454
  %v527 = vpop.f32.mrf.mxu0
  %v528 = vadd.f32 %v448, %v527
  %v529 = vpop.f32.mrf.mxu0
  %530 = vdwg.mxu0
  %v531 = vmax.f32 %v523, 0.0
  %v532 = vmax.f32 %v528, 0.0
  %v534 = vlaneseq
  %v535 = vshrl.u32 %v534, 7
  %v536 = vsub.s32 0, %v535
  %v537 = vrot.slane %v439, %v536
  %v540 = vsel %vm98, %v531, 0
  %v543 = vsel %vm98, %v532, 0
  %545 = vmatprep.subr.mxu0 0.0
  %546 = vmatpush1.msra.mxu0 0.0
  %547 = vmatprep.subr.mxu0 0.0
  %548 = vmatpush1.msra.mxu0 0.0
  %549 = vmatprep.subr.mxu0 0.0
  %550 = vmatpush1.msra.mxu0 0.0
  %551 = vmatprep.subr.mxu0 0.0
  %552 = vmatpush1.msra.mxu0 0.0
  %553 = vmatprep.subr.mxu0 0.0
  %554 = vmatpush1.msra.mxu0 0.0
  %555 = vmatprep.subr.mxu0 0.0
  %556 = vmatpush1.msra.mxu0 0.0
  %557 = vmatprep.subr.mxu0 0.0
  %558 = vmatpush1.msra.mxu0 0.0
  %559 = vmatprep.subr.mxu0 0.0
  %560 = vmatpush1.msra.mxu0 0.0
  %561 = vmatprep.subr.mxu0 0.0
  %562 = vmatpush1.msra.mxu0 %v437
  %563 = vmatprep.subr.mxu0 0.0
  %564 = vmatpush1.msra.mxu0 %v436
  %565 = vmatprep.subr.mxu0 0.0
  %566 = vmatpush1.msra.mxu0 %v435
  %567 = vmatprep.subr.mxu0 0.0
  %568 = vmatpush1.msra.mxu0 %v434
  %569 = vmatprep.subr.mxu0 0.0
  %570 = vmatpush1.msra.mxu0 %v433
  %571 = vmatprep.subr.mxu0 0.0
  %572 = vmatpush1.msra.mxu0 %v432
  %573 = vmatprep.subr.mxu0 0.0
  %574 = vmatpush1.msra.mxu0 %v431
  %575 = vmatprep.subr.mxu0 0.0
  %576 = vmatpush1.msra.mxu0 %v430
  %577 = vmatprep.subr.mxu0 0.0
  %578 = vmatpush2.msra.mxu0 0.0
  %579 = vmatprep.subr.mxu0 0.0
  %580 = vmatpush2.msra.mxu0 0.0
  %581 = vmatprep.subr.mxu0 0.0
  %582 = vmatpush2.msra.mxu0 0.0
  %583 = vmatprep.subr.mxu0 0.0
  %584 = vmatpush2.msra.mxu0 0.0
  %585 = vmatprep.subr.mxu0 0.0
  %586 = vmatpush2.msra.mxu0 0.0
  %587 = vmatprep.subr.mxu0 0.0
  %588 = vmatpush2.msra.mxu0 0.0
  %589 = vmatprep.subr.mxu0 0.0
  %590 = vmatpush2.msra.mxu0 0.0
  %591 = vmatprep.subr.mxu0 0.0
  %592 = vmatpush2.msra.mxu0 0.0
  %593 = vmatprep.subr.mxu0 0.0
  %594 = vmatpush2.msra.mxu0 0.0
  %595 = vmatprep.subr.mxu0 0.0
  %596 = vmatpush2.msra.mxu0 0.0
  %597 = vmatprep.subr.mxu0 0.0
  %598 = vmatpush2.msra.mxu0 0.0
  %599 = vmatprep.subr.mxu0 0.0
  %600 = vmatpush2.msra.mxu0 0.0
  %601 = vmatprep.subr.mxu0 0.0
  %602 = vmatpush2.msra.mxu0 0.0
  %603 = vmatprep.subr.mxu0 0.0
  %604 = vmatpush2.msra.mxu0 0.0
  %605 = vmatprep.subr.mxu0 0.0
  %606 = vmatpush2.msra.mxu0 0.0
  %607 = vmatprep.subr.mxu0 0.0
  %608 = vmatpush2.msra.mxu0 0.0
  %609 = vmatprep.mubr.f32.mxu0 0.0
  %610 = vmatmul.mubr.f32.gmra.mxu0 %v540
  %v611 = vpop.f32.mrf.mxu0
  %v612 = vadd.f32 %v537, %v611
  %v613 = vpop.f32.mrf.mxu0
  %614 = vmatprep.mubr.f32.mxu0 0.0
  %615 = vmatmul.mubr.f32.gmra.mxu0 %v543
  %v616 = vpop.f32.mrf.mxu0
  %v617 = vadd.f32 %v537, %v616
  %v618 = vpop.f32.mrf.mxu0
  %619 = vdwg.mxu0
  %v620 = vadd.f32 %v612, %v420
  %v621 = vadd.f32 %v617, %v421
  %v622 = vsel %vm202, %v620, 0.0
  %623 = vadd.xlane.f32.xlu0 %v622
  %v624 = vpop.xlane.xlu0 %623
  %v625 = vsel %vm202, %v621, 0.0
  %626 = vadd.xlane.f32.xlu0 %v625
  %v627 = vpop.xlane.xlu0 %626
  %v628 = vmul.f32 %v624, %v381
  %v629 = vmul.f32 %v627, %v381
  %v630 = vmul.f32 %v620, %v620
  %v631 = vmul.f32 %v621, %v621
  %v632 = vsel %vm202, %v630, 0.0
  %633 = vadd.xlane.f32.xlu0 %v632
  %v634 = vpop.xlane.xlu0 %633
  %v635 = vsel %vm202, %v631, 0.0
  %636 = vadd.xlane.f32.xlu0 %v635
  %v637 = vpop.xlane.xlu0 %636
  %v638 = vmul.f32 %v634, %v381
  %v639 = vmul.f32 %v637, %v381
  %v640 = vmul.f32 %v628, %v628
  %v641 = vmul.f32 %v629, %v629
  %v642 = vsub.f32 %v638, %v640
  %v643 = vsub.f32 %v639, %v641
  %v644 = vsub.f32 %v620, %v628
  %v645 = vsub.f32 %v621, %v629
  %v646 = vadd.f32 %v642, 1e-05
  %v647 = vadd.f32 %v643, 1e-05
  %v648 = vrsqrt.pop %v646
  %v649 = vrsqrt.pop %v647
  %v650 = vmul.f32 %v644, %v648
  %v651 = vmul.f32 %v645, %v649
  %v653 = vlaneseq
  %v654 = vshrl.u32 %v653, 7
  %v655 = vsub.s32 0, %v654
  %v656 = vrot.slane %v441, %v655
  %v658 = vmul.f32 %v650, %v656
  %v659 = vmul.f32 %v651, %v656
  %v661 = vlaneseq
  %v662 = vshrl.u32 %v661, 7
  %v663 = vsub.s32 0, %v662
  %v664 = vrot.slane %v443, %v663
  %v666 = vadd.f32 %v658, %v664
  %v667 = vadd.f32 %v659, %v664
  %v668 = vld [vmem:[%s10] sm:$0xff]
  %v669 = vld [vmem:[%s10 + $0x8] sm:$0xff]
  %v670 = vld [vmem:[%s10 + $0x10] sm:$0xff]
  %v671 = vld [vmem:[%s10 + $0x18] sm:$0xff]
  %s672 = scalar_lea.vmem %s10, 32
  %v673 = vld [vmem:[%s672] sm:$0xff]
  %v674 = vld [vmem:[%s672 + $0x8] sm:$0xff]
  %v675 = vld [vmem:[%s672 + $0x10] sm:$0xff]
  %v676 = vld [vmem:[%s672 + $0x18] sm:$0xff]
  %v678 = vrot.slane %v666, 2
  %v679 = vsel %vm202, %v678, 0
  %681 = vmatprep.subr.mxu0 0.0
  %682 = vmatpush1.msra.mxu0 0.0
  %683 = vmatprep.subr.mxu0 0.0
  %684 = vmatpush1.msra.mxu0 0.0
  %685 = vmatprep.subr.mxu0 0.0
  %686 = vmatpush1.msra.mxu0 0.0
  %687 = vmatprep.subr.mxu0 0.0
  %688 = vmatpush1.msra.mxu0 0.0
  %689 = vmatprep.subr.mxu0 0.0
  %690 = vmatpush1.msra.mxu0 0.0
  %691 = vmatprep.subr.mxu0 0.0
  %692 = vmatpush1.msra.mxu0 0.0
  %693 = vmatprep.subr.mxu0 0.0
  %694 = vmatpush1.msra.mxu0 0.0
  %695 = vmatprep.subr.mxu0 0.0
  %696 = vmatpush1.msra.mxu0 0.0
  %697 = vmatprep.subr.mxu0 0.0
  %698 = vmatpush1.msra.mxu0 0.0
  %699 = vmatprep.subr.mxu0 0.0
  %700 = vmatpush1.msra.mxu0 0.0
  %701 = vmatprep.subr.mxu0 0.0
  %702 = vmatpush1.msra.mxu0 0.0
  %703 = vmatprep.subr.mxu0 0.0
  %704 = vmatpush1.msra.mxu0 0.0
  %705 = vmatprep.subr.mxu0 0.0
  %706 = vmatpush1.msra.mxu0 %v676
  %707 = vmatprep.subr.mxu0 0.0
  %708 = vmatpush1.msra.mxu0 %v675
  %709 = vmatprep.subr.mxu0 0.0
  %710 = vmatpush1.msra.mxu0 %v674
  %711 = vmatprep.subr.mxu0 0.0
  %712 = vmatpush1.msra.mxu0 %v673
  %713 = vmatprep.subr.mxu0 0.0
  %714 = vmatpush2.msra.mxu0 0.0
  %715 = vmatprep.subr.mxu0 0.0
  %716 = vmatpush2.msra.mxu0 0.0
  %717 = vmatprep.subr.mxu0 0.0
  %718 = vmatpush2.msra.mxu0 0.0
  %719 = vmatprep.subr.mxu0 0.0
  %720 = vmatpush2.msra.mxu0 0.0
  %721 = vmatprep.subr.mxu0 0.0
  %722 = vmatpush2.msra.mxu0 0.0
  %723 = vmatprep.subr.mxu0 0.0
  %724 = vmatpush2.msra.mxu0 0.0
  %725 = vmatprep.subr.mxu0 0.0
  %726 = vmatpush2.msra.mxu0 0.0
  %727 = vmatprep.subr.mxu0 0.0
  %728 = vmatpush2.msra.mxu0 0.0
  %729 = vmatprep.subr.mxu0 0.0
  %730 = vmatpush2.msra.mxu0 0.0
  %731 = vmatprep.subr.mxu0 0.0
  %732 = vmatpush2.msra.mxu0 0.0
  %733 = vmatprep.subr.mxu0 0.0
  %734 = vmatpush2.msra.mxu0 0.0
  %735 = vmatprep.subr.mxu0 0.0
  %736 = vmatpush2.msra.mxu0 0.0
  %737 = vmatprep.subr.mxu0 0.0
  %738 = vmatpush2.msra.mxu0 0.0
  %739 = vmatprep.subr.mxu0 0.0
  %740 = vmatpush2.msra.mxu0 0.0
  %741 = vmatprep.subr.mxu0 0.0
  %742 = vmatpush2.msra.mxu0 0.0
  %743 = vmatprep.subr.mxu0 0.0
  %744 = vmatpush2.msra.mxu0 0.0
  %745 = vmatprep.mubr.f32.mxu0 0.0
  %746 = vmatmul.mubr.f32.gmra.mxu0 %v679
  %v747 = vpop.f32.mrf.mxu0
  %v748 = vadd.f32 0.0, %v747
  %v749 = vpop.f32.mrf.mxu0
  %750 = vdwg.mxu0
  %v751 = vsel %vm202, %v666, 0
  %753 = vmatprep.subr.mxu0 0.0
  %754 = vmatpush1.msra.mxu0 0.0
  %755 = vmatprep.subr.mxu0 0.0
  %756 = vmatpush1.msra.mxu0 0.0
  %757 = vmatprep.subr.mxu0 0.0
  %758 = vmatpush1.msra.mxu0 0.0
  %759 = vmatprep.subr.mxu0 0.0
  %760 = vmatpush1.msra.mxu0 0.0
  %761 = vmatprep.subr.mxu0 0.0
  %762 = vmatpush1.msra.mxu0 0.0
  %763 = vmatprep.subr.mxu0 0.0
  %764 = vmatpush1.msra.mxu0 0.0
  %765 = vmatprep.subr.mxu0 0.0
  %766 = vmatpush1.msra.mxu0 0.0
  %767 = vmatprep.subr.mxu0 0.0
  %768 = vmatpush1.msra.mxu0 0.0
  %769 = vmatprep.subr.mxu0 0.0
  %770 = vmatpush1.msra.mxu0 0.0
  %771 = vmatprep.subr.mxu0 0.0
  %772 = vmatpush1.msra.mxu0 0.0
  %773 = vmatprep.subr.mxu0 0.0
  %774 = vmatpush1.msra.mxu0 0.0
  %775 = vmatprep.subr.mxu0 0.0
  %776 = vmatpush1.msra.mxu0 0.0
  %777 = vmatprep.subr.mxu0 0.0
  %778 = vmatpush1.msra.mxu0 %v671
  %779 = vmatprep.subr.mxu0 0.0
  %780 = vmatpush1.msra.mxu0 %v670
  %781 = vmatprep.subr.mxu0 0.0
  %782 = vmatpush1.msra.mxu0 %v669
  %783 = vmatprep.subr.mxu0 0.0
  %784 = vmatpush1.msra.mxu0 %v668
  %785 = vmatprep.subr.mxu0 0.0
  %786 = vmatpush2.msra.mxu0 0.0
  %787 = vmatprep.subr.mxu0 0.0
  %788 = vmatpush2.msra.mxu0 0.0
  %789 = vmatprep.subr.mxu0 0.0
  %790 = vmatpush2.msra.mxu0 0.0
  %791 = vmatprep.subr.mxu0 0.0
  %792 = vmatpush2.msra.mxu0 0.0
  %793 = vmatprep.subr.mxu0 0.0
  %794 = vmatpush2.msra.mxu0 0.0
  %795 = vmatprep.subr.mxu0 0.0
  %796 = vmatpush2.msra.mxu0 0.0
  %797 = vmatprep.subr.mxu0 0.0
  %798 = vmatpush2.msra.mxu0 0.0
  %799 = vmatprep.subr.mxu0 0.0
  %800 = vmatpush2.msra.mxu0 0.0
  %801 = vmatprep.subr.mxu0 0.0
  %802 = vmatpush2.msra.mxu0 0.0
  %803 = vmatprep.subr.mxu0 0.0
  %804 = vmatpush2.msra.mxu0 0.0
  %805 = vmatprep.subr.mxu0 0.0
  %806 = vmatpush2.msra.mxu0 0.0
  %807 = vmatprep.subr.mxu0 0.0
  %808 = vmatpush2.msra.mxu0 0.0
  %809 = vmatprep.subr.mxu0 0.0
  %810 = vmatpush2.msra.mxu0 0.0
  %811 = vmatprep.subr.mxu0 0.0
  %812 = vmatpush2.msra.mxu0 0.0
  %813 = vmatprep.subr.mxu0 0.0
  %814 = vmatpush2.msra.mxu0 0.0
  %815 = vmatprep.subr.mxu0 0.0
  %816 = vmatpush2.msra.mxu0 0.0
  %817 = vmatprep.mubr.f32.mxu0 0.0
  %818 = vmatmul.mubr.f32.gmra.mxu0 %v751
  %v819 = vpop.f32.mrf.mxu0
  %v820 = vadd.f32 %v748, %v819
  %v821 = vpop.f32.mrf.mxu0
  %822 = vdwg.mxu0
  %s823 = scalar_lea.vmem %s10, 64
  %v824 = vld [vmem:[%s823] sm:$0xff]
  %v825 = vld [vmem:[%s823 + $0x8] sm:$0xff]
  %v826 = vld [vmem:[%s823 + $0x10] sm:$0xff]
  %v827 = vld [vmem:[%s823 + $0x18] sm:$0xff]
  %v828 = vrot.slane %v666, 4
  %v829 = vsel %vm202, %v828, 0
  %831 = vmatprep.subr.mxu0 0.0
  %832 = vmatpush1.msra.mxu0 0.0
  %833 = vmatprep.subr.mxu0 0.0
  %834 = vmatpush1.msra.mxu0 0.0
  %835 = vmatprep.subr.mxu0 0.0
  %836 = vmatpush1.msra.mxu0 0.0
  %837 = vmatprep.subr.mxu0 0.0
  %838 = vmatpush1.msra.mxu0 0.0
  %839 = vmatprep.subr.mxu0 0.0
  %840 = vmatpush1.msra.mxu0 0.0
  %841 = vmatprep.subr.mxu0 0.0
  %842 = vmatpush1.msra.mxu0 0.0
  %843 = vmatprep.subr.mxu0 0.0
  %844 = vmatpush1.msra.mxu0 0.0
  %845 = vmatprep.subr.mxu0 0.0
  %846 = vmatpush1.msra.mxu0 0.0
  %847 = vmatprep.subr.mxu0 0.0
  %848 = vmatpush1.msra.mxu0 0.0
  %849 = vmatprep.subr.mxu0 0.0
  %850 = vmatpush1.msra.mxu0 0.0
  %851 = vmatprep.subr.mxu0 0.0
  %852 = vmatpush1.msra.mxu0 0.0
  %853 = vmatprep.subr.mxu0 0.0
  %854 = vmatpush1.msra.mxu0 0.0
  %855 = vmatprep.subr.mxu0 0.0
  %856 = vmatpush1.msra.mxu0 %v827
  %857 = vmatprep.subr.mxu0 0.0
  %858 = vmatpush1.msra.mxu0 %v826
  %859 = vmatprep.subr.mxu0 0.0
  %860 = vmatpush1.msra.mxu0 %v825
  %861 = vmatprep.subr.mxu0 0.0
  %862 = vmatpush1.msra.mxu0 %v824
  %863 = vmatprep.subr.mxu0 0.0
  %864 = vmatpush2.msra.mxu0 0.0
  %865 = vmatprep.subr.mxu0 0.0
  %866 = vmatpush2.msra.mxu0 0.0
  %867 = vmatprep.subr.mxu0 0.0
  %868 = vmatpush2.msra.mxu0 0.0
  %869 = vmatprep.subr.mxu0 0.0
  %870 = vmatpush2.msra.mxu0 0.0
  %871 = vmatprep.subr.mxu0 0.0
  %872 = vmatpush2.msra.mxu0 0.0
  %873 = vmatprep.subr.mxu0 0.0
  %874 = vmatpush2.msra.mxu0 0.0
  %875 = vmatprep.subr.mxu0 0.0
  %876 = vmatpush2.msra.mxu0 0.0
  %877 = vmatprep.subr.mxu0 0.0
  %878 = vmatpush2.msra.mxu0 0.0
  %879 = vmatprep.subr.mxu0 0.0
  %880 = vmatpush2.msra.mxu0 0.0
  %881 = vmatprep.subr.mxu0 0.0
  %882 = vmatpush2.msra.mxu0 0.0
  %883 = vmatprep.subr.mxu0 0.0
  %884 = vmatpush2.msra.mxu0 0.0
  %885 = vmatprep.subr.mxu0 0.0
  %886 = vmatpush2.msra.mxu0 0.0
  %887 = vmatprep.subr.mxu0 0.0
  %888 = vmatpush2.msra.mxu0 0.0
  %889 = vmatprep.subr.mxu0 0.0
  %890 = vmatpush2.msra.mxu0 0.0
  %891 = vmatprep.subr.mxu0 0.0
  %892 = vmatpush2.msra.mxu0 0.0
  %893 = vmatprep.subr.mxu0 0.0
  %894 = vmatpush2.msra.mxu0 0.0
  %895 = vmatprep.mubr.f32.mxu0 0.0
  %896 = vmatmul.mubr.f32.gmra.mxu0 %v829
  %v897 = vpop.f32.mrf.mxu0
  %v898 = vadd.f32 0.0, %v897
  %v899 = vpop.f32.mrf.mxu0
  %900 = vdwg.mxu0
  %v901 = vadd.f32 %v820, %v898
  %s902 = scalar_lea.vmem %s10, 96
  %v903 = vld [vmem:[%s902] sm:$0xff]
  %v904 = vld [vmem:[%s902 + $0x8] sm:$0xff]
  %v905 = vld [vmem:[%s902 + $0x10] sm:$0xff]
  %v906 = vld [vmem:[%s902 + $0x18] sm:$0xff]
  %v907 = vrot.slane %v666, 6
  %v908 = vsel %vm202, %v907, 0
  %910 = vmatprep.subr.mxu0 0.0
  %911 = vmatpush1.msra.mxu0 0.0
  %912 = vmatprep.subr.mxu0 0.0
  %913 = vmatpush1.msra.mxu0 0.0
  %914 = vmatprep.subr.mxu0 0.0
  %915 = vmatpush1.msra.mxu0 0.0
  %916 = vmatprep.subr.mxu0 0.0
  %917 = vmatpush1.msra.mxu0 0.0
  %918 = vmatprep.subr.mxu0 0.0
  %919 = vmatpush1.msra.mxu0 0.0
  %920 = vmatprep.subr.mxu0 0.0
  %921 = vmatpush1.msra.mxu0 0.0
  %922 = vmatprep.subr.mxu0 0.0
  %923 = vmatpush1.msra.mxu0 0.0
  %924 = vmatprep.subr.mxu0 0.0
  %925 = vmatpush1.msra.mxu0 0.0
  %926 = vmatprep.subr.mxu0 0.0
  %927 = vmatpush1.msra.mxu0 0.0
  %928 = vmatprep.subr.mxu0 0.0
  %929 = vmatpush1.msra.mxu0 0.0
  %930 = vmatprep.subr.mxu0 0.0
  %931 = vmatpush1.msra.mxu0 0.0
  %932 = vmatprep.subr.mxu0 0.0
  %933 = vmatpush1.msra.mxu0 0.0
  %934 = vmatprep.subr.mxu0 0.0
  %935 = vmatpush1.msra.mxu0 %v906
  %936 = vmatprep.subr.mxu0 0.0
  %937 = vmatpush1.msra.mxu0 %v905
  %938 = vmatprep.subr.mxu0 0.0
  %939 = vmatpush1.msra.mxu0 %v904
  %940 = vmatprep.subr.mxu0 0.0
  %941 = vmatpush1.msra.mxu0 %v903
  %942 = vmatprep.subr.mxu0 0.0
  %943 = vmatpush2.msra.mxu0 0.0
  %944 = vmatprep.subr.mxu0 0.0
  %945 = vmatpush2.msra.mxu0 0.0
  %946 = vmatprep.subr.mxu0 0.0
  %947 = vmatpush2.msra.mxu0 0.0
  %948 = vmatprep.subr.mxu0 0.0
  %949 = vmatpush2.msra.mxu0 0.0
  %950 = vmatprep.subr.mxu0 0.0
  %951 = vmatpush2.msra.mxu0 0.0
  %952 = vmatprep.subr.mxu0 0.0
  %953 = vmatpush2.msra.mxu0 0.0
  %954 = vmatprep.subr.mxu0 0.0
  %955 = vmatpush2.msra.mxu0 0.0
  %956 = vmatprep.subr.mxu0 0.0
  %957 = vmatpush2.msra.mxu0 0.0
  %958 = vmatprep.subr.mxu0 0.0
  %959 = vmatpush2.msra.mxu0 0.0
  %960 = vmatprep.subr.mxu0 0.0
  %961 = vmatpush2.msra.mxu0 0.0
  %962 = vmatprep.subr.mxu0 0.0
  %963 = vmatpush2.msra.mxu0 0.0
  %964 = vmatprep.subr.mxu0 0.0
  %965 = vmatpush2.msra.mxu0 0.0
  %966 = vmatprep.subr.mxu0 0.0
  %967 = vmatpush2.msra.mxu0 0.0
  %968 = vmatprep.subr.mxu0 0.0
  %969 = vmatpush2.msra.mxu0 0.0
  %970 = vmatprep.subr.mxu0 0.0
  %971 = vmatpush2.msra.mxu0 0.0
  %972 = vmatprep.subr.mxu0 0.0
  %973 = vmatpush2.msra.mxu0 0.0
  %974 = vmatprep.mubr.f32.mxu0 0.0
  %975 = vmatmul.mubr.f32.gmra.mxu0 %v908
  %v976 = vpop.f32.mrf.mxu0
  %v977 = vadd.f32 0.0, %v976
  %v978 = vpop.f32.mrf.mxu0
  %979 = vdwg.mxu0
  %v980 = vadd.f32 %v901, %v977
  %s981 = scalar_lea.vmem %s10, 128
  %v982 = vld [vmem:[%s981] sm:$0xff]
  %v983 = vld [vmem:[%s981 + $0x8] sm:$0xff]
  %v984 = vld [vmem:[%s981 + $0x10] sm:$0xff]
  %v985 = vld [vmem:[%s981 + $0x18] sm:$0xff]
  %v987 = vsel %vm202, %v667, 0
  %989 = vmatprep.subr.mxu0 0.0
  %990 = vmatpush1.msra.mxu0 0.0
  %991 = vmatprep.subr.mxu0 0.0
  %992 = vmatpush1.msra.mxu0 0.0
  %993 = vmatprep.subr.mxu0 0.0
  %994 = vmatpush1.msra.mxu0 0.0
  %995 = vmatprep.subr.mxu0 0.0
  %996 = vmatpush1.msra.mxu0 0.0
  %997 = vmatprep.subr.mxu0 0.0
  %998 = vmatpush1.msra.mxu0 0.0
  %999 = vmatprep.subr.mxu0 0.0
  %1000 = vmatpush1.msra.mxu0 0.0
  %1001 = vmatprep.subr.mxu0 0.0
  %1002 = vmatpush1.msra.mxu0 0.0
  %1003 = vmatprep.subr.mxu0 0.0
  %1004 = vmatpush1.msra.mxu0 0.0
  %1005 = vmatprep.subr.mxu0 0.0
  %1006 = vmatpush1.msra.mxu0 0.0
  %1007 = vmatprep.subr.mxu0 0.0
  %1008 = vmatpush1.msra.mxu0 0.0
  %1009 = vmatprep.subr.mxu0 0.0
  %1010 = vmatpush1.msra.mxu0 0.0
  %1011 = vmatprep.subr.mxu0 0.0
  %1012 = vmatpush1.msra.mxu0 0.0
  %1013 = vmatprep.subr.mxu0 0.0
  %1014 = vmatpush1.msra.mxu0 %v985
  %1015 = vmatprep.subr.mxu0 0.0
  %1016 = vmatpush1.msra.mxu0 %v984
  %1017 = vmatprep.subr.mxu0 0.0
  %1018 = vmatpush1.msra.mxu0 %v983
  %1019 = vmatprep.subr.mxu0 0.0
  %1020 = vmatpush1.msra.mxu0 %v982
  %1021 = vmatprep.subr.mxu0 0.0
  %1022 = vmatpush2.msra.mxu0 0.0
  %1023 = vmatprep.subr.mxu0 0.0
  %1024 = vmatpush2.msra.mxu0 0.0
  %1025 = vmatprep.subr.mxu0 0.0
  %1026 = vmatpush2.msra.mxu0 0.0
  %1027 = vmatprep.subr.mxu0 0.0
  %1028 = vmatpush2.msra.mxu0 0.0
  %1029 = vmatprep.subr.mxu0 0.0
  %1030 = vmatpush2.msra.mxu0 0.0
  %1031 = vmatprep.subr.mxu0 0.0
  %1032 = vmatpush2.msra.mxu0 0.0
  %1033 = vmatprep.subr.mxu0 0.0
  %1034 = vmatpush2.msra.mxu0 0.0
  %1035 = vmatprep.subr.mxu0 0.0
  %1036 = vmatpush2.msra.mxu0 0.0
  %1037 = vmatprep.subr.mxu0 0.0
  %1038 = vmatpush2.msra.mxu0 0.0
  %1039 = vmatprep.subr.mxu0 0.0
  %1040 = vmatpush2.msra.mxu0 0.0
  %1041 = vmatprep.subr.mxu0 0.0
  %1042 = vmatpush2.msra.mxu0 0.0
  %1043 = vmatprep.subr.mxu0 0.0
  %1044 = vmatpush2.msra.mxu0 0.0
  %1045 = vmatprep.subr.mxu0 0.0
  %1046 = vmatpush2.msra.mxu0 0.0
  %1047 = vmatprep.subr.mxu0 0.0
  %1048 = vmatpush2.msra.mxu0 0.0
  %1049 = vmatprep.subr.mxu0 0.0
  %1050 = vmatpush2.msra.mxu0 0.0
  %1051 = vmatprep.subr.mxu0 0.0
  %1052 = vmatpush2.msra.mxu0 0.0
  %1053 = vmatprep.mubr.f32.mxu0 0.0
  %1054 = vmatmul.mubr.f32.gmra.mxu0 %v987
  %v1055 = vpop.f32.mrf.mxu0
  %v1056 = vadd.f32 0.0, %v1055
  %v1057 = vpop.f32.mrf.mxu0
  %1058 = vdwg.mxu0
  %v1059 = vadd.f32 %v980, %v1056
  %s1060 = scalar_lea.vmem %s10, 160
  %v1061 = vld [vmem:[%s1060] sm:$0xff]
  %v1062 = vld [vmem:[%s1060 + $0x8] sm:$0xff]
  %v1063 = vld [vmem:[%s1060 + $0x10] sm:$0xff]
  %v1064 = vld [vmem:[%s1060 + $0x18] sm:$0xff]
  %v1065 = vrot.slane %v667, 2
  %v1066 = vsel %vm202, %v1065, 0
  %1068 = vmatprep.subr.mxu0 0.0
  %1069 = vmatpush1.msra.mxu0 0.0
  %1070 = vmatprep.subr.mxu0 0.0
  %1071 = vmatpush1.msra.mxu0 0.0
  %1072 = vmatprep.subr.mxu0 0.0
  %1073 = vmatpush1.msra.mxu0 0.0
  %1074 = vmatprep.subr.mxu0 0.0
  %1075 = vmatpush1.msra.mxu0 0.0
  %1076 = vmatprep.subr.mxu0 0.0
  %1077 = vmatpush1.msra.mxu0 0.0
  %1078 = vmatprep.subr.mxu0 0.0
  %1079 = vmatpush1.msra.mxu0 0.0
  %1080 = vmatprep.subr.mxu0 0.0
  %1081 = vmatpush1.msra.mxu0 0.0
  %1082 = vmatprep.subr.mxu0 0.0
  %1083 = vmatpush1.msra.mxu0 0.0
  %1084 = vmatprep.subr.mxu0 0.0
  %1085 = vmatpush1.msra.mxu0 0.0
  %1086 = vmatprep.subr.mxu0 0.0
  %1087 = vmatpush1.msra.mxu0 0.0
  %1088 = vmatprep.subr.mxu0 0.0
  %1089 = vmatpush1.msra.mxu0 0.0
  %1090 = vmatprep.subr.mxu0 0.0
  %1091 = vmatpush1.msra.mxu0 0.0
  %1092 = vmatprep.subr.mxu0 0.0
  %1093 = vmatpush1.msra.mxu0 %v1064
  %1094 = vmatprep.subr.mxu0 0.0
  %1095 = vmatpush1.msra.mxu0 %v1063
  %1096 = vmatprep.subr.mxu0 0.0
  %1097 = vmatpush1.msra.mxu0 %v1062
  %1098 = vmatprep.subr.mxu0 0.0
  %1099 = vmatpush1.msra.mxu0 %v1061
  %1100 = vmatprep.subr.mxu0 0.0
  %1101 = vmatpush2.msra.mxu0 0.0
  %1102 = vmatprep.subr.mxu0 0.0
  %1103 = vmatpush2.msra.mxu0 0.0
  %1104 = vmatprep.subr.mxu0 0.0
  %1105 = vmatpush2.msra.mxu0 0.0
  %1106 = vmatprep.subr.mxu0 0.0
  %1107 = vmatpush2.msra.mxu0 0.0
  %1108 = vmatprep.subr.mxu0 0.0
  %1109 = vmatpush2.msra.mxu0 0.0
  %1110 = vmatprep.subr.mxu0 0.0
  %1111 = vmatpush2.msra.mxu0 0.0
  %1112 = vmatprep.subr.mxu0 0.0
  %1113 = vmatpush2.msra.mxu0 0.0
  %1114 = vmatprep.subr.mxu0 0.0
  %1115 = vmatpush2.msra.mxu0 0.0
  %1116 = vmatprep.subr.mxu0 0.0
  %1117 = vmatpush2.msra.mxu0 0.0
  %1118 = vmatprep.subr.mxu0 0.0
  %1119 = vmatpush2.msra.mxu0 0.0
  %1120 = vmatprep.subr.mxu0 0.0
  %1121 = vmatpush2.msra.mxu0 0.0
  %1122 = vmatprep.subr.mxu0 0.0
  %1123 = vmatpush2.msra.mxu0 0.0
  %1124 = vmatprep.subr.mxu0 0.0
  %1125 = vmatpush2.msra.mxu0 0.0
  %1126 = vmatprep.subr.mxu0 0.0
  %1127 = vmatpush2.msra.mxu0 0.0
  %1128 = vmatprep.subr.mxu0 0.0
  %1129 = vmatpush2.msra.mxu0 0.0
  %1130 = vmatprep.subr.mxu0 0.0
  %1131 = vmatpush2.msra.mxu0 0.0
  %1132 = vmatprep.mubr.f32.mxu0 0.0
  %1133 = vmatmul.mubr.f32.gmra.mxu0 %v1066
  %v1134 = vpop.f32.mrf.mxu0
  %v1135 = vadd.f32 0.0, %v1134
  %v1136 = vpop.f32.mrf.mxu0
  %1137 = vdwg.mxu0
  %v1138 = vadd.f32 %v1059, %v1135
  %s1139 = scalar_lea.vmem %s10, 192
  %v1140 = vld [vmem:[%s1139] sm:$0xff]
  %v1141 = vld [vmem:[%s1139 + $0x8] sm:$0xff]
  %v1142 = vld [vmem:[%s1139 + $0x10] sm:$0xff]
  %v1143 = vld [vmem:[%s1139 + $0x18] sm:$0xff]
  %v1144 = vrot.slane %v667, 4
  %v1145 = vsel %vm202, %v1144, 0
  %1147 = vmatprep.subr.mxu0 0.0
  %1148 = vmatpush1.msra.mxu0 0.0
  %1149 = vmatprep.subr.mxu0 0.0
  %1150 = vmatpush1.msra.mxu0 0.0
  %1151 = vmatprep.subr.mxu0 0.0
  %1152 = vmatpush1.msra.mxu0 0.0
  %1153 = vmatprep.subr.mxu0 0.0
  %1154 = vmatpush1.msra.mxu0 0.0
  %1155 = vmatprep.subr.mxu0 0.0
  %1156 = vmatpush1.msra.mxu0 0.0
  %1157 = vmatprep.subr.mxu0 0.0
  %1158 = vmatpush1.msra.mxu0 0.0
  %1159 = vmatprep.subr.mxu0 0.0
  %1160 = vmatpush1.msra.mxu0 0.0
  %1161 = vmatprep.subr.mxu0 0.0
  %1162 = vmatpush1.msra.mxu0 0.0
  %1163 = vmatprep.subr.mxu0 0.0
  %1164 = vmatpush1.msra.mxu0 0.0
  %1165 = vmatprep.subr.mxu0 0.0
  %1166 = vmatpush1.msra.mxu0 0.0
  %1167 = vmatprep.subr.mxu0 0.0
  %1168 = vmatpush1.msra.mxu0 0.0
  %1169 = vmatprep.subr.mxu0 0.0
  %1170 = vmatpush1.msra.mxu0 0.0
  %1171 = vmatprep.subr.mxu0 0.0
  %1172 = vmatpush1.msra.mxu0 %v1143
  %1173 = vmatprep.subr.mxu0 0.0
  %1174 = vmatpush1.msra.mxu0 %v1142
  %1175 = vmatprep.subr.mxu0 0.0
  %1176 = vmatpush1.msra.mxu0 %v1141
  %1177 = vmatprep.subr.mxu0 0.0
  %1178 = vmatpush1.msra.mxu0 %v1140
  %1179 = vmatprep.subr.mxu0 0.0
  %1180 = vmatpush2.msra.mxu0 0.0
  %1181 = vmatprep.subr.mxu0 0.0
  %1182 = vmatpush2.msra.mxu0 0.0
  %1183 = vmatprep.subr.mxu0 0.0
  %1184 = vmatpush2.msra.mxu0 0.0
  %1185 = vmatprep.subr.mxu0 0.0
  %1186 = vmatpush2.msra.mxu0 0.0
  %1187 = vmatprep.subr.mxu0 0.0
  %1188 = vmatpush2.msra.mxu0 0.0
  %1189 = vmatprep.subr.mxu0 0.0
  %1190 = vmatpush2.msra.mxu0 0.0
  %1191 = vmatprep.subr.mxu0 0.0
  %1192 = vmatpush2.msra.mxu0 0.0
  %1193 = vmatprep.subr.mxu0 0.0
  %1194 = vmatpush2.msra.mxu0 0.0
  %1195 = vmatprep.subr.mxu0 0.0
  %1196 = vmatpush2.msra.mxu0 0.0
  %1197 = vmatprep.subr.mxu0 0.0
  %1198 = vmatpush2.msra.mxu0 0.0
  %1199 = vmatprep.subr.mxu0 0.0
  %1200 = vmatpush2.msra.mxu0 0.0
  %1201 = vmatprep.subr.mxu0 0.0
  %1202 = vmatpush2.msra.mxu0 0.0
  %1203 = vmatprep.subr.mxu0 0.0
  %1204 = vmatpush2.msra.mxu0 0.0
  %1205 = vmatprep.subr.mxu0 0.0
  %1206 = vmatpush2.msra.mxu0 0.0
  %1207 = vmatprep.subr.mxu0 0.0
  %1208 = vmatpush2.msra.mxu0 0.0
  %1209 = vmatprep.subr.mxu0 0.0
  %1210 = vmatpush2.msra.mxu0 0.0
  %1211 = vmatprep.mubr.f32.mxu0 0.0
  %1212 = vmatmul.mubr.f32.gmra.mxu0 %v1145
  %v1213 = vpop.f32.mrf.mxu0
  %v1214 = vadd.f32 0.0, %v1213
  %v1215 = vpop.f32.mrf.mxu0
  %1216 = vdwg.mxu0
  %v1217 = vadd.f32 %v1138, %v1214
  %s1218 = scalar_lea.vmem %s10, 224
  %v1219 = vld [vmem:[%s1218] sm:$0xff]
  %v1220 = vld [vmem:[%s1218 + $0x8] sm:$0xff]
  %v1221 = vld [vmem:[%s1218 + $0x10] sm:$0xff]
  %v1222 = vld [vmem:[%s1218 + $0x18] sm:$0xff]
  %v1223 = vrot.slane %v667, 6
  %v1224 = vsel %vm202, %v1223, 0
  %1226 = vmatprep.subr.mxu0 0.0
  %1227 = vmatpush1.msra.mxu0 0.0
  %1228 = vmatprep.subr.mxu0 0.0
  %1229 = vmatpush1.msra.mxu0 0.0
  %1230 = vmatprep.subr.mxu0 0.0
  %1231 = vmatpush1.msra.mxu0 0.0
  %1232 = vmatprep.subr.mxu0 0.0
  %1233 = vmatpush1.msra.mxu0 0.0
  %1234 = vmatprep.subr.mxu0 0.0
  %1235 = vmatpush1.msra.mxu0 0.0
  %1236 = vmatprep.subr.mxu0 0.0
  %1237 = vmatpush1.msra.mxu0 0.0
  %1238 = vmatprep.subr.mxu0 0.0
  %1239 = vmatpush1.msra.mxu0 0.0
  %1240 = vmatprep.subr.mxu0 0.0
  %1241 = vmatpush1.msra.mxu0 0.0
  %1242 = vmatprep.subr.mxu0 0.0
  %1243 = vmatpush1.msra.mxu0 0.0
  %1244 = vmatprep.subr.mxu0 0.0
  %1245 = vmatpush1.msra.mxu0 0.0
  %1246 = vmatprep.subr.mxu0 0.0
  %1247 = vmatpush1.msra.mxu0 0.0
  %1248 = vmatprep.subr.mxu0 0.0
  %1249 = vmatpush1.msra.mxu0 0.0
  %1250 = vmatprep.subr.mxu0 0.0
  %1251 = vmatpush1.msra.mxu0 %v1222
  %1252 = vmatprep.subr.mxu0 0.0
  %1253 = vmatpush1.msra.mxu0 %v1221
  %1254 = vmatprep.subr.mxu0 0.0
  %1255 = vmatpush1.msra.mxu0 %v1220
  %1256 = vmatprep.subr.mxu0 0.0
  %1257 = vmatpush1.msra.mxu0 %v1219
  %1258 = vmatprep.subr.mxu0 0.0
  %1259 = vmatpush2.msra.mxu0 0.0
  %1260 = vmatprep.subr.mxu0 0.0
  %1261 = vmatpush2.msra.mxu0 0.0
  %1262 = vmatprep.subr.mxu0 0.0
  %1263 = vmatpush2.msra.mxu0 0.0
  %1264 = vmatprep.subr.mxu0 0.0
  %1265 = vmatpush2.msra.mxu0 0.0
  %1266 = vmatprep.subr.mxu0 0.0
  %1267 = vmatpush2.msra.mxu0 0.0
  %1268 = vmatprep.subr.mxu0 0.0
  %1269 = vmatpush2.msra.mxu0 0.0
  %1270 = vmatprep.subr.mxu0 0.0
  %1271 = vmatpush2.msra.mxu0 0.0
  %1272 = vmatprep.subr.mxu0 0.0
  %1273 = vmatpush2.msra.mxu0 0.0
  %1274 = vmatprep.subr.mxu0 0.0
  %1275 = vmatpush2.msra.mxu0 0.0
  %1276 = vmatprep.subr.mxu0 0.0
  %1277 = vmatpush2.msra.mxu0 0.0
  %1278 = vmatprep.subr.mxu0 0.0
  %1279 = vmatpush2.msra.mxu0 0.0
  %1280 = vmatprep.subr.mxu0 0.0
  %1281 = vmatpush2.msra.mxu0 0.0
  %1282 = vmatprep.subr.mxu0 0.0
  %1283 = vmatpush2.msra.mxu0 0.0
  %1284 = vmatprep.subr.mxu0 0.0
  %1285 = vmatpush2.msra.mxu0 0.0
  %1286 = vmatprep.subr.mxu0 0.0
  %1287 = vmatpush2.msra.mxu0 0.0
  %1288 = vmatprep.subr.mxu0 0.0
  %1289 = vmatpush2.msra.mxu0 0.0
  %1290 = vmatprep.mubr.f32.mxu0 0.0
  %1291 = vmatmul.mubr.f32.gmra.mxu0 %v1224
  %v1292 = vpop.f32.mrf.mxu0
  %v1293 = vadd.f32 0.0, %v1292
  %v1294 = vpop.f32.mrf.mxu0
  %1295 = vdwg.mxu0
  %v1296 = vadd.f32 %v1217, %v1293
  %v1297 = vld [vmem:[%s11] sm:$0x1]
  %v1299 = vlaneseq
  %v1300 = vshrl.u32 %v1299, 7
  %v1301 = vsub.s32 0, %v1300
  %v1302 = vrot.slane %v1297, %v1301
  %v1304 = vadd.f32 %v1296, %v1302
  %v1305 = vld [vmem:[%s12] sm:$0xff]
  %v1306 = vld [vmem:[%s12 + $0x8] sm:$0xff]
  %v1307 = vld [vmem:[%s12 + $0x10] sm:$0xff]
  %v1308 = vld [vmem:[%s12 + $0x18] sm:$0xff]
  %v1309 = vld [vmem:[%s13] sm:$0x1]
  %v1310 = vld [vmem:[%s14] sm:$0xff]
  %v1311 = vld [vmem:[%s14 + $0x8] sm:$0xff]
  %v1312 = vld [vmem:[%s14 + $0x10] sm:$0xff]
  %v1313 = vld [vmem:[%s14 + $0x18] sm:$0xff]
  %v1314 = vld [vmem:[%s14 + $0x20] sm:$0xff]
  %v1315 = vld [vmem:[%s14 + $0x28] sm:$0xff]
  %v1316 = vld [vmem:[%s14 + $0x30] sm:$0xff]
  %v1317 = vld [vmem:[%s14 + $0x38] sm:$0xff]
  %v1318 = vld [vmem:[%s15] sm:$0x1]
  %v1319 = vld [vmem:[%s16] sm:$0x1]
  %v1320 = vld [vmem:[%s17] sm:$0x1]
  %v1322 = vlaneseq
  %v1323 = vshrl.u32 %v1322, 7
  %v1324 = vsub.s32 0, %v1323
  %v1325 = vrot.slane %v1309, %v1324
  %v1328 = vsel %vm202, %v1304, 0
  %1330 = vmatprep.subr.mxu0 0.0
  %1331 = vmatpush1.msra.mxu0 0.0
  %1332 = vmatprep.subr.mxu0 0.0
  %1333 = vmatpush1.msra.mxu0 0.0
  %1334 = vmatprep.subr.mxu0 0.0
  %1335 = vmatpush1.msra.mxu0 0.0
  %1336 = vmatprep.subr.mxu0 0.0
  %1337 = vmatpush1.msra.mxu0 0.0
  %1338 = vmatprep.subr.mxu0 0.0
  %1339 = vmatpush1.msra.mxu0 0.0
  %1340 = vmatprep.subr.mxu0 0.0
  %1341 = vmatpush1.msra.mxu0 0.0
  %1342 = vmatprep.subr.mxu0 0.0
  %1343 = vmatpush1.msra.mxu0 0.0
  %1344 = vmatprep.subr.mxu0 0.0
  %1345 = vmatpush1.msra.mxu0 0.0
  %1346 = vmatprep.subr.mxu0 0.0
  %1347 = vmatpush1.msra.mxu0 0.0
  %1348 = vmatprep.subr.mxu0 0.0
  %1349 = vmatpush1.msra.mxu0 0.0
  %1350 = vmatprep.subr.mxu0 0.0
  %1351 = vmatpush1.msra.mxu0 0.0
  %1352 = vmatprep.subr.mxu0 0.0
  %1353 = vmatpush1.msra.mxu0 0.0
  %1354 = vmatprep.subr.mxu0 0.0
  %1355 = vmatpush1.msra.mxu0 %v1308
  %1356 = vmatprep.subr.mxu0 0.0
  %1357 = vmatpush1.msra.mxu0 %v1307
  %1358 = vmatprep.subr.mxu0 0.0
  %1359 = vmatpush1.msra.mxu0 %v1306
  %1360 = vmatprep.subr.mxu0 0.0
  %1361 = vmatpush1.msra.mxu0 %v1305
  %1362 = vmatprep.subr.mxu0 0.0
  %1363 = vmatpush2.msra.mxu0 0.0
  %1364 = vmatprep.subr.mxu0 0.0
  %1365 = vmatpush2.msra.mxu0 0.0
  %1366 = vmatprep.subr.mxu0 0.0
  %1367 = vmatpush2.msra.mxu0 0.0
  %1368 = vmatprep.subr.mxu0 0.0
  %1369 = vmatpush2.msra.mxu0 0.0
  %1370 = vmatprep.subr.mxu0 0.0
  %1371 = vmatpush2.msra.mxu0 0.0
  %1372 = vmatprep.subr.mxu0 0.0
  %1373 = vmatpush2.msra.mxu0 0.0
  %1374 = vmatprep.subr.mxu0 0.0
  %1375 = vmatpush2.msra.mxu0 0.0
  %1376 = vmatprep.subr.mxu0 0.0
  %1377 = vmatpush2.msra.mxu0 0.0
  %1378 = vmatprep.subr.mxu0 0.0
  %1379 = vmatpush2.msra.mxu0 0.0
  %1380 = vmatprep.subr.mxu0 0.0
  %1381 = vmatpush2.msra.mxu0 0.0
  %1382 = vmatprep.subr.mxu0 0.0
  %1383 = vmatpush2.msra.mxu0 0.0
  %1384 = vmatprep.subr.mxu0 0.0
  %1385 = vmatpush2.msra.mxu0 0.0
  %1386 = vmatprep.subr.mxu0 0.0
  %1387 = vmatpush2.msra.mxu0 0.0
  %1388 = vmatprep.subr.mxu0 0.0
  %1389 = vmatpush2.msra.mxu0 0.0
  %1390 = vmatprep.subr.mxu0 0.0
  %1391 = vmatpush2.msra.mxu0 0.0
  %1392 = vmatprep.subr.mxu0 0.0
  %1393 = vmatpush2.msra.mxu0 0.0
  %1394 = vmatprep.mubr.f32.mxu0 0.0
  %1395 = vmatmul.mubr.f32.gmra.mxu0 %v1328
  %v1396 = vpop.f32.mrf.mxu0
  %v1397 = vadd.f32 %v1325, %v1396
  %v1398 = vpop.f32.mrf.mxu0
  %1399 = vdwg.mxu0
  %v1400 = vmax.f32 %v1397, 0.0
  %v1402 = vlaneseq
  %v1403 = vshrl.u32 %v1402, 7
  %v1404 = vsub.s32 0, %v1403
  %v1405 = vrot.slane %v1318, %v1404
  %v1408 = vsel %vm98, %v1400, 0
  %1410 = vmatprep.subr.mxu0 0.0
  %1411 = vmatpush1.msra.mxu0 0.0
  %1412 = vmatprep.subr.mxu0 0.0
  %1413 = vmatpush1.msra.mxu0 0.0
  %1414 = vmatprep.subr.mxu0 0.0
  %1415 = vmatpush1.msra.mxu0 0.0
  %1416 = vmatprep.subr.mxu0 0.0
  %1417 = vmatpush1.msra.mxu0 0.0
  %1418 = vmatprep.subr.mxu0 0.0
  %1419 = vmatpush1.msra.mxu0 0.0
  %1420 = vmatprep.subr.mxu0 0.0
  %1421 = vmatpush1.msra.mxu0 0.0
  %1422 = vmatprep.subr.mxu0 0.0
  %1423 = vmatpush1.msra.mxu0 0.0
  %1424 = vmatprep.subr.mxu0 0.0
  %1425 = vmatpush1.msra.mxu0 0.0
  %1426 = vmatprep.subr.mxu0 0.0
  %1427 = vmatpush1.msra.mxu0 %v1317
  %1428 = vmatprep.subr.mxu0 0.0
  %1429 = vmatpush1.msra.mxu0 %v1316
  %1430 = vmatprep.subr.mxu0 0.0
  %1431 = vmatpush1.msra.mxu0 %v1315
  %1432 = vmatprep.subr.mxu0 0.0
  %1433 = vmatpush1.msra.mxu0 %v1314
  %1434 = vmatprep.subr.mxu0 0.0
  %1435 = vmatpush1.msra.mxu0 %v1313
  %1436 = vmatprep.subr.mxu0 0.0
  %1437 = vmatpush1.msra.mxu0 %v1312
  %1438 = vmatprep.subr.mxu0 0.0
  %1439 = vmatpush1.msra.mxu0 %v1311
  %1440 = vmatprep.subr.mxu0 0.0
  %1441 = vmatpush1.msra.mxu0 %v1310
  %1442 = vmatprep.subr.mxu0 0.0
  %1443 = vmatpush2.msra.mxu0 0.0
  %1444 = vmatprep.subr.mxu0 0.0
  %1445 = vmatpush2.msra.mxu0 0.0
  %1446 = vmatprep.subr.mxu0 0.0
  %1447 = vmatpush2.msra.mxu0 0.0
  %1448 = vmatprep.subr.mxu0 0.0
  %1449 = vmatpush2.msra.mxu0 0.0
  %1450 = vmatprep.subr.mxu0 0.0
  %1451 = vmatpush2.msra.mxu0 0.0
  %1452 = vmatprep.subr.mxu0 0.0
  %1453 = vmatpush2.msra.mxu0 0.0
  %1454 = vmatprep.subr.mxu0 0.0
  %1455 = vmatpush2.msra.mxu0 0.0
  %1456 = vmatprep.subr.mxu0 0.0
  %1457 = vmatpush2.msra.mxu0 0.0
  %1458 = vmatprep.subr.mxu0 0.0
  %1459 = vmatpush2.msra.mxu0 0.0
  %1460 = vmatprep.subr.mxu0 0.0
  %1461 = vmatpush2.msra.mxu0 0.0
  %1462 = vmatprep.subr.mxu0 0.0
  %1463 = vmatpush2.msra.mxu0 0.0
  %1464 = vmatprep.subr.mxu0 0.0
  %1465 = vmatpush2.msra.mxu0 0.0
  %1466 = vmatprep.subr.mxu0 0.0
  %1467 = vmatpush2.msra.mxu0 0.0
  %1468 = vmatprep.subr.mxu0 0.0
  %1469 = vmatpush2.msra.mxu0 0.0
  %1470 = vmatprep.subr.mxu0 0.0
  %1471 = vmatpush2.msra.mxu0 0.0
  %1472 = vmatprep.subr.mxu0 0.0
  %1473 = vmatpush2.msra.mxu0 0.0
  %1474 = vmatprep.mubr.f32.mxu0 0.0
  %1475 = vmatmul.mubr.f32.gmra.mxu0 %v1408
  %v1476 = vpop.f32.mrf.mxu0
  %v1477 = vadd.f32 %v1405, %v1476
  %v1478 = vpop.f32.mrf.mxu0
  %1479 = vdwg.mxu0
  %v1480 = vadd.f32 %v1477, %v1304
  %vm1481 = vcmask 254976
  %v1482 = vsel %vm1481, %v1480, 0.0
  %1483 = vadd.xlane.f32.xlu0 %v1482
  %v1484 = vpop.xlane.xlu0 %1483
  %v1485 = vmul.f32 %v1484, %v381
  %v1486 = vmul.f32 %v1480, %v1480
  %v1487 = vsel %vm1481, %v1486, 0.0
  %1488 = vadd.xlane.f32.xlu0 %v1487
  %v1489 = vpop.xlane.xlu0 %1488
  %v1490 = vmul.f32 %v1489, %v381
  %v1491 = vmul.f32 %v1485, %v1485
  %v1492 = vsub.f32 %v1490, %v1491
  %v1493 = vsub.f32 %v1480, %v1485
  %v1494 = vadd.f32 %v1492, 1e-05
  %v1495 = vrsqrt.pop %v1494
  %v1496 = vmul.f32 %v1493, %v1495
  %v1498 = vlaneseq
  %v1499 = vshrl.u32 %v1498, 7
  %v1500 = vsub.s32 0, %v1499
  %v1501 = vrot.slane %v1319, %v1500
  %v1503 = vmul.f32 %v1496, %v1501
  %v1505 = vlaneseq
  %v1506 = vshrl.u32 %v1505, 7
  %v1507 = vsub.s32 0, %v1506
  %v1508 = vrot.slane %v1320, %v1507
  %v1510 = vadd.f32 %v1503, %v1508
  %s1511 = scalar_lea.vmem %s12, 32
  %v1512 = vld [vmem:[%s1511] sm:$0xff]
  %v1513 = vld [vmem:[%s1511 + $0x8] sm:$0xff]
  %v1514 = vld [vmem:[%s1511 + $0x10] sm:$0xff]
  %v1515 = vld [vmem:[%s1511 + $0x18] sm:$0xff]
  %s1516 = scalar_lea.vmem %s13, 1
  %v1517 = vld [vmem:[%s1516] sm:$0x1]
  %s1518 = scalar_lea.vmem %s14, 64
  %v1519 = vld [vmem:[%s1518] sm:$0xff]
  %v1520 = vld [vmem:[%s1518 + $0x8] sm:$0xff]
  %v1521 = vld [vmem:[%s1518 + $0x10] sm:$0xff]
  %v1522 = vld [vmem:[%s1518 + $0x18] sm:$0xff]
  %v1523 = vld [vmem:[%s1518 + $0x20] sm:$0xff]
  %v1524 = vld [vmem:[%s1518 + $0x28] sm:$0xff]
  %v1525 = vld [vmem:[%s1518 + $0x30] sm:$0xff]
  %v1526 = vld [vmem:[%s1518 + $0x38] sm:$0xff]
  %s1527 = scalar_lea.vmem %s15, 1
  %v1528 = vld [vmem:[%s1527] sm:$0x1]
  %s1529 = scalar_lea.vmem %s16, 1
  %v1530 = vld [vmem:[%s1529] sm:$0x1]
  %s1531 = scalar_lea.vmem %s17, 1
  %v1532 = vld [vmem:[%s1531] sm:$0x1]
  %v1534 = vlaneseq
  %v1535 = vshrl.u32 %v1534, 7
  %v1536 = vsub.s32 0, %v1535
  %v1537 = vrot.slane %v1517, %v1536
  %v1540 = vsel %vm202, %v1510, 0
  %1542 = vmatprep.subr.mxu0 0.0
  %1543 = vmatpush1.msra.mxu0 0.0
  %1544 = vmatprep.subr.mxu0 0.0
  %1545 = vmatpush1.msra.mxu0 0.0
  %1546 = vmatprep.subr.mxu0 0.0
  %1547 = vmatpush1.msra.mxu0 0.0
  %1548 = vmatprep.subr.mxu0 0.0
  %1549 = vmatpush1.msra.mxu0 0.0
  %1550 = vmatprep.subr.mxu0 0.0
  %1551 = vmatpush1.msra.mxu0 0.0
  %1552 = vmatprep.subr.mxu0 0.0
  %1553 = vmatpush1.msra.mxu0 0.0
  %1554 = vmatprep.subr.mxu0 0.0
  %1555 = vmatpush1.msra.mxu0 0.0
  %1556 = vmatprep.subr.mxu0 0.0
  %1557 = vmatpush1.msra.mxu0 0.0
  %1558 = vmatprep.subr.mxu0 0.0
  %1559 = vmatpush1.msra.mxu0 0.0
  %1560 = vmatprep.subr.mxu0 0.0
  %1561 = vmatpush1.msra.mxu0 0.0
  %1562 = vmatprep.subr.mxu0 0.0
  %1563 = vmatpush1.msra.mxu0 0.0
  %1564 = vmatprep.subr.mxu0 0.0
  %1565 = vmatpush1.msra.mxu0 0.0
  %1566 = vmatprep.subr.mxu0 0.0
  %1567 = vmatpush1.msra.mxu0 %v1515
  %1568 = vmatprep.subr.mxu0 0.0
  %1569 = vmatpush1.msra.mxu0 %v1514
  %1570 = vmatprep.subr.mxu0 0.0
  %1571 = vmatpush1.msra.mxu0 %v1513
  %1572 = vmatprep.subr.mxu0 0.0
  %1573 = vmatpush1.msra.mxu0 %v1512
  %1574 = vmatprep.subr.mxu0 0.0
  %1575 = vmatpush2.msra.mxu0 0.0
  %1576 = vmatprep.subr.mxu0 0.0
  %1577 = vmatpush2.msra.mxu0 0.0
  %1578 = vmatprep.subr.mxu0 0.0
  %1579 = vmatpush2.msra.mxu0 0.0
  %1580 = vmatprep.subr.mxu0 0.0
  %1581 = vmatpush2.msra.mxu0 0.0
  %1582 = vmatprep.subr.mxu0 0.0
  %1583 = vmatpush2.msra.mxu0 0.0
  %1584 = vmatprep.subr.mxu0 0.0
  %1585 = vmatpush2.msra.mxu0 0.0
  %1586 = vmatprep.subr.mxu0 0.0
  %1587 = vmatpush2.msra.mxu0 0.0
  %1588 = vmatprep.subr.mxu0 0.0
  %1589 = vmatpush2.msra.mxu0 0.0
  %1590 = vmatprep.subr.mxu0 0.0
  %1591 = vmatpush2.msra.mxu0 0.0
  %1592 = vmatprep.subr.mxu0 0.0
  %1593 = vmatpush2.msra.mxu0 0.0
  %1594 = vmatprep.subr.mxu0 0.0
  %1595 = vmatpush2.msra.mxu0 0.0
  %1596 = vmatprep.subr.mxu0 0.0
  %1597 = vmatpush2.msra.mxu0 0.0
  %1598 = vmatprep.subr.mxu0 0.0
  %1599 = vmatpush2.msra.mxu0 0.0
  %1600 = vmatprep.subr.mxu0 0.0
  %1601 = vmatpush2.msra.mxu0 0.0
  %1602 = vmatprep.subr.mxu0 0.0
  %1603 = vmatpush2.msra.mxu0 0.0
  %1604 = vmatprep.subr.mxu0 0.0
  %1605 = vmatpush2.msra.mxu0 0.0
  %1606 = vmatprep.mubr.f32.mxu0 0.0
  %1607 = vmatmul.mubr.f32.gmra.mxu0 %v1540
  %v1608 = vpop.f32.mrf.mxu0
  %v1609 = vadd.f32 %v1537, %v1608
  %v1610 = vpop.f32.mrf.mxu0
  %1611 = vdwg.mxu0
  %v1612 = vmax.f32 %v1609, 0.0
  %v1614 = vlaneseq
  %v1615 = vshrl.u32 %v1614, 7
  %v1616 = vsub.s32 0, %v1615
  %v1617 = vrot.slane %v1528, %v1616
  %v1620 = vsel %vm98, %v1612, 0
  %1622 = vmatprep.subr.mxu0 0.0
  %1623 = vmatpush1.msra.mxu0 0.0
  %1624 = vmatprep.subr.mxu0 0.0
  %1625 = vmatpush1.msra.mxu0 0.0
  %1626 = vmatprep.subr.mxu0 0.0
  %1627 = vmatpush1.msra.mxu0 0.0
  %1628 = vmatprep.subr.mxu0 0.0
  %1629 = vmatpush1.msra.mxu0 0.0
  %1630 = vmatprep.subr.mxu0 0.0
  %1631 = vmatpush1.msra.mxu0 0.0
  %1632 = vmatprep.subr.mxu0 0.0
  %1633 = vmatpush1.msra.mxu0 0.0
  %1634 = vmatprep.subr.mxu0 0.0
  %1635 = vmatpush1.msra.mxu0 0.0
  %1636 = vmatprep.subr.mxu0 0.0
  %1637 = vmatpush1.msra.mxu0 0.0
  %1638 = vmatprep.subr.mxu0 0.0
  %1639 = vmatpush1.msra.mxu0 %v1526
  %1640 = vmatprep.subr.mxu0 0.0
  %1641 = vmatpush1.msra.mxu0 %v1525
  %1642 = vmatprep.subr.mxu0 0.0
  %1643 = vmatpush1.msra.mxu0 %v1524
  %1644 = vmatprep.subr.mxu0 0.0
  %1645 = vmatpush1.msra.mxu0 %v1523
  %1646 = vmatprep.subr.mxu0 0.0
  %1647 = vmatpush1.msra.mxu0 %v1522
  %1648 = vmatprep.subr.mxu0 0.0
  %1649 = vmatpush1.msra.mxu0 %v1521
  %1650 = vmatprep.subr.mxu0 0.0
  %1651 = vmatpush1.msra.mxu0 %v1520
  %1652 = vmatprep.subr.mxu0 0.0
  %1653 = vmatpush1.msra.mxu0 %v1519
  %1654 = vmatprep.subr.mxu0 0.0
  %1655 = vmatpush2.msra.mxu0 0.0
  %1656 = vmatprep.subr.mxu0 0.0
  %1657 = vmatpush2.msra.mxu0 0.0
  %1658 = vmatprep.subr.mxu0 0.0
  %1659 = vmatpush2.msra.mxu0 0.0
  %1660 = vmatprep.subr.mxu0 0.0
  %1661 = vmatpush2.msra.mxu0 0.0
  %1662 = vmatprep.subr.mxu0 0.0
  %1663 = vmatpush2.msra.mxu0 0.0
  %1664 = vmatprep.subr.mxu0 0.0
  %1665 = vmatpush2.msra.mxu0 0.0
  %1666 = vmatprep.subr.mxu0 0.0
  %1667 = vmatpush2.msra.mxu0 0.0
  %1668 = vmatprep.subr.mxu0 0.0
  %1669 = vmatpush2.msra.mxu0 0.0
  %1670 = vmatprep.subr.mxu0 0.0
  %1671 = vmatpush2.msra.mxu0 0.0
  %1672 = vmatprep.subr.mxu0 0.0
  %1673 = vmatpush2.msra.mxu0 0.0
  %1674 = vmatprep.subr.mxu0 0.0
  %1675 = vmatpush2.msra.mxu0 0.0
  %1676 = vmatprep.subr.mxu0 0.0
  %1677 = vmatpush2.msra.mxu0 0.0
  %1678 = vmatprep.subr.mxu0 0.0
  %1679 = vmatpush2.msra.mxu0 0.0
  %1680 = vmatprep.subr.mxu0 0.0
  %1681 = vmatpush2.msra.mxu0 0.0
  %1682 = vmatprep.subr.mxu0 0.0
  %1683 = vmatpush2.msra.mxu0 0.0
  %1684 = vmatprep.subr.mxu0 0.0
  %1685 = vmatpush2.msra.mxu0 0.0
  %1686 = vmatprep.mubr.f32.mxu0 0.0
  %1687 = vmatmul.mubr.f32.gmra.mxu0 %v1620
  %v1688 = vpop.f32.mrf.mxu0
  %v1689 = vadd.f32 %v1617, %v1688
  %v1690 = vpop.f32.mrf.mxu0
  %1691 = vdwg.mxu0
  %v1692 = vadd.f32 %v1689, %v1510
  %v1693 = vsel %vm1481, %v1692, 0.0
  %1694 = vadd.xlane.f32.xlu0 %v1693
  %v1695 = vpop.xlane.xlu0 %1694
  %v1696 = vmul.f32 %v1695, %v381
  %v1697 = vmul.f32 %v1692, %v1692
  %v1698 = vsel %vm1481, %v1697, 0.0
  %1699 = vadd.xlane.f32.xlu0 %v1698
  %v1700 = vpop.xlane.xlu0 %1699
  %v1701 = vmul.f32 %v1700, %v381
  %v1702 = vmul.f32 %v1696, %v1696
  %v1703 = vsub.f32 %v1701, %v1702
  %v1704 = vsub.f32 %v1692, %v1696
  %v1705 = vadd.f32 %v1703, 1e-05
  %v1706 = vrsqrt.pop %v1705
  %v1707 = vmul.f32 %v1704, %v1706
  %v1709 = vlaneseq
  %v1710 = vshrl.u32 %v1709, 7
  %v1711 = vsub.s32 0, %v1710
  %v1712 = vrot.slane %v1530, %v1711
  %v1714 = vmul.f32 %v1707, %v1712
  %v1716 = vlaneseq
  %v1717 = vshrl.u32 %v1716, 7
  %v1718 = vsub.s32 0, %v1717
  %v1719 = vrot.slane %v1532, %v1718
  %v1721 = vadd.f32 %v1714, %v1719
  %v1722 = vmax.f32 %v1721, 0.0
  %v1723 = vld [vmem:[%s18] sm:$0xff]
  %v1724 = vld [vmem:[%s18 + $0x8] sm:$0xff]
  %v1725 = vld [vmem:[%s18 + $0x10] sm:$0xff]
  %v1726 = vld [vmem:[%s18 + $0x18] sm:$0xff]
  %v1727 = vld [vmem:[#allocation2] sm:$0x1]
  %v1729 = vlaneseq
  %v1730 = vshrl.u32 %v1729, 7
  %v1731 = vsub.s32 0, %v1730
  %v1732 = vrot.slane %v1727, %v1731
  %v1735 = vsel %vm202, %v1722, 0
  %1737 = vmatprep.subr.mxu0 0.0
  %1738 = vmatpush1.msra.mxu0 0.0
  %1739 = vmatprep.subr.mxu0 0.0
  %1740 = vmatpush1.msra.mxu0 0.0
  %1741 = vmatprep.subr.mxu0 0.0
  %1742 = vmatpush1.msra.mxu0 0.0
  %1743 = vmatprep.subr.mxu0 0.0
  %1744 = vmatpush1.msra.mxu0 0.0
  %1745 = vmatprep.subr.mxu0 0.0
  %1746 = vmatpush1.msra.mxu0 0.0
  %1747 = vmatprep.subr.mxu0 0.0
  %1748 = vmatpush1.msra.mxu0 0.0
  %1749 = vmatprep.subr.mxu0 0.0
  %1750 = vmatpush1.msra.mxu0 0.0
  %1751 = vmatprep.subr.mxu0 0.0
  %1752 = vmatpush1.msra.mxu0 0.0
  %1753 = vmatprep.subr.mxu0 0.0
  %1754 = vmatpush1.msra.mxu0 0.0
  %1755 = vmatprep.subr.mxu0 0.0
  %1756 = vmatpush1.msra.mxu0 0.0
  %1757 = vmatprep.subr.mxu0 0.0
  %1758 = vmatpush1.msra.mxu0 0.0
  %1759 = vmatprep.subr.mxu0 0.0
  %1760 = vmatpush1.msra.mxu0 0.0
  %1761 = vmatprep.subr.mxu0 0.0
  %1762 = vmatpush1.msra.mxu0 %v1726
  %1763 = vmatprep.subr.mxu0 0.0
  %1764 = vmatpush1.msra.mxu0 %v1725
  %1765 = vmatprep.subr.mxu0 0.0
  %1766 = vmatpush1.msra.mxu0 %v1724
  %1767 = vmatprep.subr.mxu0 0.0
  %1768 = vmatpush1.msra.mxu0 %v1723
  %1769 = vmatprep.subr.mxu0 0.0
  %1770 = vmatpush2.msra.mxu0 0.0
  %1771 = vmatprep.subr.mxu0 0.0
  %1772 = vmatpush2.msra.mxu0 0.0
  %1773 = vmatprep.subr.mxu0 0.0
  %1774 = vmatpush2.msra.mxu0 0.0
  %1775 = vmatprep.subr.mxu0 0.0
  %1776 = vmatpush2.msra.mxu0 0.0
  %1777 = vmatprep.subr.mxu0 0.0
  %1778 = vmatpush2.msra.mxu0 0.0
  %1779 = vmatprep.subr.mxu0 0.0
  %1780 = vmatpush2.msra.mxu0 0.0
  %1781 = vmatprep.subr.mxu0 0.0
  %1782 = vmatpush2.msra.mxu0 0.0
  %1783 = vmatprep.subr.mxu0 0.0
  %1784 = vmatpush2.msra.mxu0 0.0
  %1785 = vmatprep.subr.mxu0 0.0
  %1786 = vmatpush2.msra.mxu0 0.0
  %1787 = vmatprep.subr.mxu0 0.0
  %1788 = vmatpush2.msra.mxu0 0.0
  %1789 = vmatprep.subr.mxu0 0.0
  %1790 = vmatpush2.msra.mxu0 0.0
  %1791 = vmatprep.subr.mxu0 0.0
  %1792 = vmatpush2.msra.mxu0 0.0
  %1793 = vmatprep.subr.mxu0 0.0
  %1794 = vmatpush2.msra.mxu0 0.0
  %1795 = vmatprep.subr.mxu0 0.0
  %1796 = vmatpush2.msra.mxu0 0.0
  %1797 = vmatprep.subr.mxu0 0.0
  %1798 = vmatpush2.msra.mxu0 0.0
  %1799 = vmatprep.subr.mxu0 0.0
  %1800 = vmatpush2.msra.mxu0 0.0
  %1801 = vmatprep.mubr.f32.mxu0 0.0
  %1802 = vmatmul.mubr.f32.gmra.mxu0 %v1735
  %v1803 = vpop.f32.mrf.mxu0
  %v1804 = vadd.f32 %v1732, %v1803
  %v1805 = vpop.f32.mrf.mxu0
  %1806 = vdwg.mxu0
  %vm1807 = vcmask 1024
  %1808 = vst.msk [vmem:[%s20] sm:$0x3] %vm1807, %v1804
  // Predicated region
  $region82: #{model_forward.1} parent=0 // pred_check
    _
  $region83: #{model_forward.1} parent=0 // pred_check_branch
    %1810 = sbr.rel (0) target = $region85
  $region84: #{model_forward.1} parent=0 // pred_region
    _
  $region85: #{model_forward.1} parent=0 // pred_fallthru
    _
  // Predicated region
  $region86: #{model_forward.1} parent=0 // pred_check
    _
  $region87: #{model_forward.1} parent=0 // pred_check_branch
    %1812 = sbr.rel (0) target = $region89
  $region88: #{model_forward.1} parent=0 // pred_region
    _
  $region89: #{model_forward.1} parent=0 // pred_fallthru
    _

</llo_original>
